<compile_context>
chip_gen: v6e
topology: v6e:2x2x1
jax: 0.10.0
libtpu: 0.0.40
codegen_flags: <defaults>
</compile_context>

<pallas_src>
import jax
import jax.numpy as jnp
from jax import lax
from jax.experimental import pallas as pl
from jax.experimental.pallas import tpu as pltpu

R = 5        # rows of x (top-k index domain)
F = 4        # Linear in_features
K = 5        # Linear out_features
TOPK = 3
LANES = 128


def _mymodule_kernel(x_ref, w_ref, c_ref, vals_ref, idx_ref):
    """Vreg-dense batch kernel.

    x_ref    : (R*F, SUB, TBL) f32/bf16 VMEM -- row i*F+j holds x[:, i, j];
               batch element b sits at (sublane, lane) = (b // LB, b % LB)
               of the full padded (SUB, LB) slab.
    w_ref    : (K, F) f32 SMEM -- linear.weight
    c_ref    : (R, K) f32 SMEM -- fused constant  param.T @ W.T + bias
    vals_ref : (TOPK, SUB, TBL) f32 VMEM -- top-3 values
    idx_ref  : (TOPK, SUB, TBL) i32 VMEM -- top-3 indices
    """
    sub = x_ref.shape[1]
    tbl = x_ref.shape[2]
    nch = tbl // LANES

    # Hoist the W / C scalar reads (SMEM sld) out of the chunk loop.
    w = [[w_ref[k, j] for j in range(F)] for k in range(K)]
    c = [[c_ref[i, k] for k in range(K)] for i in range(R)]

    neg_inf = jnp.full((sub, LANES), -jnp.inf, jnp.float32)
    zero_i = jnp.zeros((sub, LANES), jnp.int32)

    def row_sum(i, off):
        # s[b] = sum_k relu( sum_j W[k, j] * x[b, i, j] + C[i, k] )
        xr = [x_ref[i * F + j, :, pl.ds(off, LANES)].astype(jnp.float32)
              for j in range(F)]
        s = None
        for k in range(K):
            acc = xr[0] * w[k][0]
            for j in range(1, F):
                acc = acc + xr[j] * w[k][j]
            h = jnp.maximum(acc + c[i][k], 0.0)
            s = h if s is None else s + h
        return s

    def chunk(ci, carry):
        off = pl.multiple_of(ci * LANES, LANES)

        # i = 0 seeds the running top-3 for free.
        v1 = row_sum(0, off)
        i1 = zero_i
        v2, i2 = neg_inf, zero_i
        v3, i3 = neg_inf, zero_i

        # Insert candidates (s, i); strict '>' with lower index winning ties
        # (same tie rule as lax.top_k).
        for i in range(1, R):
            s = row_sum(i, off)
            ii = jnp.int32(i)
            c1 = s > v1
            c2 = s > v2
            c3 = s > v3
            v3 = jnp.where(c2, v2, jnp.where(c3, s, v3))
            i3 = jnp.where(c2, i2, jnp.where(c3, ii, i3))
            v2 = jnp.where(c1, v1, jnp.where(c2, s, v2))
            i2 = jnp.where(c1, i1, jnp.where(c2, ii, i2))
            v1 = jnp.where(c1, s, v1)
            i1 = jnp.where(c1, ii, i1)

        # Dense (SUB, 128) row stores -- no sublane-masked vst.
        vals_ref[0, :, pl.ds(off, LANES)] = v1
        vals_ref[1, :, pl.ds(off, LANES)] = v2
        vals_ref[2, :, pl.ds(off, LANES)] = v3
        idx_ref[0, :, pl.ds(off, LANES)] = i1
        idx_ref[1, :, pl.ds(off, LANES)] = i2
        idx_ref[2, :, pl.ds(off, LANES)] = i3
        return carry

    lax.fori_loop(0, nch, chunk, 0, unroll=min(2, nch))


def mymodule_forward(x, param, lin_w, lin_b, *, batch_tile=32768):
    """x: (B, 5, 4) f32 or bf16; param: (4, 5); lin_w: (5, 4); lin_b: (5,).

    Returns (values, indices) of topk(sum(relu(Linear(x + param.T)), -1), 3),
    shapes (B, 3) f32 / i32.  (torch.topk would return int64 indices; int32 is
    sufficient for the 0..4 index domain.)
    """
    B = x.shape[0]
    in_dtype = jnp.bfloat16 if x.dtype == jnp.bfloat16 else jnp.float32
    sub = 16 if in_dtype == jnp.bfloat16 else 8       # native sublane pack
    unit = sub * LANES                                # smallest vreg-dense tile

    # Algebraic fold: Linear(x + param.T) = x @ W.T + (param.T @ W.T + b)
    w = lin_w.astype(jnp.float32)                                       # (K, F)
    c = (param.T.astype(jnp.float32) @ w.T
         + lin_b.astype(jnp.float32)[None, :])                          # (R, K)

    # Batch tile: multiple of `unit`; prefer >= 2 grid steps so v7x's two
    # TensorCores split the parallel axis.
    bt = max(unit, (batch_tile + unit - 1) // unit * unit)
    b_unit = (B + unit - 1) // unit * unit
    if b_unit <= bt and b_unit % (2 * unit) == 0:
        tb = b_unit // 2
    else:
        tb = min(bt, b_unit)
    bp = (b_unit + tb - 1) // tb * tb
    grid = (bp // tb,)

    # Sublane/lane-dense batch layout: (R*F, SUB, BP/SUB); batch b -> (s, l)
    # with b = s * (BP // SUB) + l.  Padded lanes compute garbage that is
    # sliced off below.
    x_t = jnp.transpose(x.astype(in_dtype), (1, 2, 0)).reshape(R * F, B)
    if bp != B:
        x_t = jnp.pad(x_t, ((0, 0), (0, bp - B)))
    x_t = x_t.reshape(R * F, sub, bp // sub)

    vals, idxs = pl.pallas_call(
        _mymodule_kernel,
        out_shape=(jax.ShapeDtypeStruct((TOPK, sub, bp // sub), jnp.float32),
                   jax.ShapeDtypeStruct((TOPK, sub, bp // sub), jnp.int32)),
        grid=grid,
        in_specs=[
            pl.BlockSpec((R * F, sub, tb // sub), lambda b: (0, 0, b)),   # x slab
            pl.BlockSpec(memory_space=pltpu.MemorySpace.SMEM),            # W
            pl.BlockSpec(memory_space=pltpu.MemorySpace.SMEM),            # fused C
        ],
        out_specs=(
            pl.BlockSpec((TOPK, sub, tb // sub), lambda b: (0, 0, b)),
            pl.BlockSpec((TOPK, sub, tb // sub), lambda b: (0, 0, b)),
        ),
        compiler_params=pltpu.CompilerParams(
            dimension_semantics=("parallel",)),
    )(x_t, w, c)

    # back to torch.topk layout (B, TOPK)
    vals = vals.reshape(TOPK, bp)[:, :B].T
    idxs = idxs.reshape(TOPK, bp)[:, :B].T
    return vals, idxs


def _check(x, vals, idxs, param, lin_w, lin_b, atol=1e-5):
    """Validate against a pure-JAX reference (robust to fp tie-order)."""
    add = x + param.T[None, :, :]
    h = jnp.maximum(jnp.einsum("bij,kj->bik", add, lin_w) + lin_b, 0.0)
    s = jnp.sum(h, axis=-1)                                   # (B, R)
    rv, _ = lax.top_k(s, TOPK)
    assert vals.shape == (x.shape[0], TOPK) and idxs.shape == vals.shape
    assert jnp.allclose(vals, rv, atol=atol), "top-k values mismatch"
    # Indices must point at scores equal to the reported values.
    gathered = jnp.take_along_axis(s, idxs, axis=1)
    assert jnp.allclose(gathered, vals, atol=atol), "top-k indices inconsistent"
    # Indices must be in range and distinct per row.
    assert bool(jnp.all((idxs >= 0) & (idxs < R)))
    si = jnp.sort(idxs, axis=1)
    assert bool(jnp.all(si[:, 1:] != si[:, :-1])), "duplicate top-k indices"


if __name__ == "__main__":
    key = jax.random.PRNGKey(0)
    kp, kw, kb, k1, k2, k3 = jax.random.split(key, 6)

    param = jax.random.uniform(kp, (F, R), dtype=jnp.float32)               # nn.Parameter(torch.rand(4,5))
    lin_w = jax.random.uniform(kw, (K, F), dtype=jnp.float32) * 0.5 - 0.25  # Linear(4,5).weight
    lin_b = jax.random.uniform(kb, (K,), dtype=jnp.float32) * 0.5 - 0.25    # Linear(4,5).bias

    # small module-consistent input (B, 5, 4), single grid step
    x1 = jax.random.uniform(k1, (2, R, F), dtype=jnp.float32)
    v1, i1 = mymodule_forward(x1, param, lin_w, lin_b)
    jax.block_until_ready((v1, i1))
    _check(x1, v1, i1, param, lin_w, lin_b)

    # multi-block batch grid + padding with a small tile
    x2 = jax.random.uniform(k2, (2500, R, F), dtype=jnp.float32)
    v2, i2 = mymodule_forward(x2, param, lin_w, lin_b, batch_tile=1024)
    jax.block_until_ready((v2, i2))
    _check(x2, v2, i2, param, lin_w, lin_b)

    # bf16 input path (halved HBM reads, (16,128) chunks, 2-step parallel grid);
    # reference uses the same bf16-rounded input so math matches.
    x3 = jax.random.uniform(k3, (4096, R, F), dtype=jnp.float32)
    x3_bf = x3.astype(jnp.bfloat16)
    v3, i3 = mymodule_forward(x3_bf, param, lin_w, lin_b)
    jax.block_until_ready((v3, i3))
    _check(x3_bf.astype(jnp.float32), v3, i3, param, lin_w, lin_b, atol=1e-4)

    print("KERNEL_OK")
</pallas_src>

<mosaic_0001>
module attributes {stable_mosaic.version = 11 : i64} {
  func.func @_mymodule_kernel(%arg0: i32, %arg1: memref<20x8x128xf32, #tpu.memory_space<vmem>>, %arg2: memref<5x4xf32, #tpu.memory_space<smem>>, %arg3: memref<5x5xf32, #tpu.memory_space<smem>>, %arg4: memref<3x8x128xf32, #tpu.memory_space<vmem>>, %arg5: memref<3x8x128xi32, #tpu.memory_space<vmem>>) attributes {dimension_semantics = [#tpu.dimension_semantics<parallel>], iteration_bounds = array<i64: 1>, scalar_prefetch = 0 : i64, scratch_operands = 0 : i64, tpu.core_type = #tpu.core_type<tc>, window_params = [{transform_indices = @transform_0, window_bounds = array<i64: 20, 8, 128>}, {transform_indices = @transform_1, window_bounds = array<i64: 5, 4>}, {transform_indices = @transform_2, window_bounds = array<i64: 5, 5>}, {transform_indices = @transform_3, window_bounds = array<i64: 3, 8, 128>}, {transform_indices = @transform_4, window_bounds = array<i64: 3, 8, 128>}]} {
    %c0 = arith.constant 0 : index
    %c0_0 = arith.constant 0 : index
    %0 = memref.load %arg2[%c0, %c0_0] : memref<5x4xf32, #tpu.memory_space<smem>>
    %c0_1 = arith.constant 0 : index
    %c1 = arith.constant 1 : index
    %1 = memref.load %arg2[%c0_1, %c1] : memref<5x4xf32, #tpu.memory_space<smem>>
    %c0_2 = arith.constant 0 : index
    %c2 = arith.constant 2 : index
    %2 = memref.load %arg2[%c0_2, %c2] : memref<5x4xf32, #tpu.memory_space<smem>>
    %c0_3 = arith.constant 0 : index
    %c3 = arith.constant 3 : index
    %3 = memref.load %arg2[%c0_3, %c3] : memref<5x4xf32, #tpu.memory_space<smem>>
    %c1_4 = arith.constant 1 : index
    %c0_5 = arith.constant 0 : index
    %4 = memref.load %arg2[%c1_4, %c0_5] : memref<5x4xf32, #tpu.memory_space<smem>>
    %c1_6 = arith.constant 1 : index
    %c1_7 = arith.constant 1 : index
    %5 = memref.load %arg2[%c1_6, %c1_7] : memref<5x4xf32, #tpu.memory_space<smem>>
    %c1_8 = arith.constant 1 : index
    %c2_9 = arith.constant 2 : index
    %6 = memref.load %arg2[%c1_8, %c2_9] : memref<5x4xf32, #tpu.memory_space<smem>>
    %c1_10 = arith.constant 1 : index
    %c3_11 = arith.constant 3 : index
    %7 = memref.load %arg2[%c1_10, %c3_11] : memref<5x4xf32, #tpu.memory_space<smem>>
    %c2_12 = arith.constant 2 : index
    %c0_13 = arith.constant 0 : index
    %8 = memref.load %arg2[%c2_12, %c0_13] : memref<5x4xf32, #tpu.memory_space<smem>>
    %c2_14 = arith.constant 2 : index
    %c1_15 = arith.constant 1 : index
    %9 = memref.load %arg2[%c2_14, %c1_15] : memref<5x4xf32, #tpu.memory_space<smem>>
    %c2_16 = arith.constant 2 : index
    %c2_17 = arith.constant 2 : index
    %10 = memref.load %arg2[%c2_16, %c2_17] : memref<5x4xf32, #tpu.memory_space<smem>>
    %c2_18 = arith.constant 2 : index
    %c3_19 = arith.constant 3 : index
    %11 = memref.load %arg2[%c2_18, %c3_19] : memref<5x4xf32, #tpu.memory_space<smem>>
    %c3_20 = arith.constant 3 : index
    %c0_21 = arith.constant 0 : index
    %12 = memref.load %arg2[%c3_20, %c0_21] : memref<5x4xf32, #tpu.memory_space<smem>>
    %c3_22 = arith.constant 3 : index
    %c1_23 = arith.constant 1 : index
    %13 = memref.load %arg2[%c3_22, %c1_23] : memref<5x4xf32, #tpu.memory_space<smem>>
    %c3_24 = arith.constant 3 : index
    %c2_25 = arith.constant 2 : index
    %14 = memref.load %arg2[%c3_24, %c2_25] : memref<5x4xf32, #tpu.memory_space<smem>>
    %c3_26 = arith.constant 3 : index
    %c3_27 = arith.constant 3 : index
    %15 = memref.load %arg2[%c3_26, %c3_27] : memref<5x4xf32, #tpu.memory_space<smem>>
    %c4 = arith.constant 4 : index
    %c0_28 = arith.constant 0 : index
    %16 = memref.load %arg2[%c4, %c0_28] : memref<5x4xf32, #tpu.memory_space<smem>>
    %c4_29 = arith.constant 4 : index
    %c1_30 = arith.constant 1 : index
    %17 = memref.load %arg2[%c4_29, %c1_30] : memref<5x4xf32, #tpu.memory_space<smem>>
    %c4_31 = arith.constant 4 : index
    %c2_32 = arith.constant 2 : index
    %18 = memref.load %arg2[%c4_31, %c2_32] : memref<5x4xf32, #tpu.memory_space<smem>>
    %c4_33 = arith.constant 4 : index
    %c3_34 = arith.constant 3 : index
    %19 = memref.load %arg2[%c4_33, %c3_34] : memref<5x4xf32, #tpu.memory_space<smem>>
    %c0_35 = arith.constant 0 : index
    %c0_36 = arith.constant 0 : index
    %20 = memref.load %arg3[%c0_35, %c0_36] : memref<5x5xf32, #tpu.memory_space<smem>>
    %c0_37 = arith.constant 0 : index
    %c1_38 = arith.constant 1 : index
    %21 = memref.load %arg3[%c0_37, %c1_38] : memref<5x5xf32, #tpu.memory_space<smem>>
    %c0_39 = arith.constant 0 : index
    %c2_40 = arith.constant 2 : index
    %22 = memref.load %arg3[%c0_39, %c2_40] : memref<5x5xf32, #tpu.memory_space<smem>>
    %c0_41 = arith.constant 0 : index
    %c3_42 = arith.constant 3 : index
    %23 = memref.load %arg3[%c0_41, %c3_42] : memref<5x5xf32, #tpu.memory_space<smem>>
    %c0_43 = arith.constant 0 : index
    %c4_44 = arith.constant 4 : index
    %24 = memref.load %arg3[%c0_43, %c4_44] : memref<5x5xf32, #tpu.memory_space<smem>>
    %c1_45 = arith.constant 1 : index
    %c0_46 = arith.constant 0 : index
    %25 = memref.load %arg3[%c1_45, %c0_46] : memref<5x5xf32, #tpu.memory_space<smem>>
    %c1_47 = arith.constant 1 : index
    %c1_48 = arith.constant 1 : index
    %26 = memref.load %arg3[%c1_47, %c1_48] : memref<5x5xf32, #tpu.memory_space<smem>>
    %c1_49 = arith.constant 1 : index
    %c2_50 = arith.constant 2 : index
    %27 = memref.load %arg3[%c1_49, %c2_50] : memref<5x5xf32, #tpu.memory_space<smem>>
    %c1_51 = arith.constant 1 : index
    %c3_52 = arith.constant 3 : index
    %28 = memref.load %arg3[%c1_51, %c3_52] : memref<5x5xf32, #tpu.memory_space<smem>>
    %c1_53 = arith.constant 1 : index
    %c4_54 = arith.constant 4 : index
    %29 = memref.load %arg3[%c1_53, %c4_54] : memref<5x5xf32, #tpu.memory_space<smem>>
    %c2_55 = arith.constant 2 : index
    %c0_56 = arith.constant 0 : index
    %30 = memref.load %arg3[%c2_55, %c0_56] : memref<5x5xf32, #tpu.memory_space<smem>>
    %c2_57 = arith.constant 2 : index
    %c1_58 = arith.constant 1 : index
    %31 = memref.load %arg3[%c2_57, %c1_58] : memref<5x5xf32, #tpu.memory_space<smem>>
    %c2_59 = arith.constant 2 : index
    %c2_60 = arith.constant 2 : index
    %32 = memref.load %arg3[%c2_59, %c2_60] : memref<5x5xf32, #tpu.memory_space<smem>>
    %c2_61 = arith.constant 2 : index
    %c3_62 = arith.constant 3 : index
    %33 = memref.load %arg3[%c2_61, %c3_62] : memref<5x5xf32, #tpu.memory_space<smem>>
    %c2_63 = arith.constant 2 : index
    %c4_64 = arith.constant 4 : index
    %34 = memref.load %arg3[%c2_63, %c4_64] : memref<5x5xf32, #tpu.memory_space<smem>>
    %c3_65 = arith.constant 3 : index
    %c0_66 = arith.constant 0 : index
    %35 = memref.load %arg3[%c3_65, %c0_66] : memref<5x5xf32, #tpu.memory_space<smem>>
    %c3_67 = arith.constant 3 : index
    %c1_68 = arith.constant 1 : index
    %36 = memref.load %arg3[%c3_67, %c1_68] : memref<5x5xf32, #tpu.memory_space<smem>>
    %c3_69 = arith.constant 3 : index
    %c2_70 = arith.constant 2 : index
    %37 = memref.load %arg3[%c3_69, %c2_70] : memref<5x5xf32, #tpu.memory_space<smem>>
    %c3_71 = arith.constant 3 : index
    %c3_72 = arith.constant 3 : index
    %38 = memref.load %arg3[%c3_71, %c3_72] : memref<5x5xf32, #tpu.memory_space<smem>>
    %c3_73 = arith.constant 3 : index
    %c4_74 = arith.constant 4 : index
    %39 = memref.load %arg3[%c3_73, %c4_74] : memref<5x5xf32, #tpu.memory_space<smem>>
    %c4_75 = arith.constant 4 : index
    %c0_76 = arith.constant 0 : index
    %40 = memref.load %arg3[%c4_75, %c0_76] : memref<5x5xf32, #tpu.memory_space<smem>>
    %c4_77 = arith.constant 4 : index
    %c1_78 = arith.constant 1 : index
    %41 = memref.load %arg3[%c4_77, %c1_78] : memref<5x5xf32, #tpu.memory_space<smem>>
    %c4_79 = arith.constant 4 : index
    %c2_80 = arith.constant 2 : index
    %42 = memref.load %arg3[%c4_79, %c2_80] : memref<5x5xf32, #tpu.memory_space<smem>>
    %c4_81 = arith.constant 4 : index
    %c3_82 = arith.constant 3 : index
    %43 = memref.load %arg3[%c4_81, %c3_82] : memref<5x5xf32, #tpu.memory_space<smem>>
    %c4_83 = arith.constant 4 : index
    %c4_84 = arith.constant 4 : index
    %44 = memref.load %arg3[%c4_83, %c4_84] : memref<5x5xf32, #tpu.memory_space<smem>>
    %cst = arith.constant 0xFF800000 : f32
    %45 = vector.broadcast %cst : f32 to vector<8x128xf32>
    %c0_i32 = arith.constant 0 : i32
    %46 = vector.broadcast %c0_i32 : i32 to vector<8x128xi32>
    %c0_i32_85 = arith.constant 0 : i32
    %c128_i32 = arith.constant 128 : i32
    %47 = arith.muli %c0_i32_85, %c128_i32 : i32
    %48 = tpu.assume_multiple %47, 128 : i32
    %c0_86 = arith.constant 0 : index
    %c0_87 = arith.constant 0 : index
    %49 = arith.index_cast %48 : i32 to index
    %50 = vector.load %arg1[%c0_86, %c0_87, %49] : memref<20x8x128xf32, #tpu.memory_space<vmem>>, vector<1x8x128xf32>
    %51 = vector.shape_cast %50 : vector<1x8x128xf32> to vector<8x128xf32>
    %c1_88 = arith.constant 1 : index
    %c0_89 = arith.constant 0 : index
    %52 = arith.index_cast %48 : i32 to index
    %53 = vector.load %arg1[%c1_88, %c0_89, %52] : memref<20x8x128xf32, #tpu.memory_space<vmem>>, vector<1x8x128xf32>
    %54 = vector.shape_cast %53 : vector<1x8x128xf32> to vector<8x128xf32>
    %c2_90 = arith.constant 2 : index
    %c0_91 = arith.constant 0 : index
    %55 = arith.index_cast %48 : i32 to index
    %56 = vector.load %arg1[%c2_90, %c0_91, %55] : memref<20x8x128xf32, #tpu.memory_space<vmem>>, vector<1x8x128xf32>
    %57 = vector.shape_cast %56 : vector<1x8x128xf32> to vector<8x128xf32>
    %c3_92 = arith.constant 3 : index
    %c0_93 = arith.constant 0 : index
    %58 = arith.index_cast %48 : i32 to index
    %59 = vector.load %arg1[%c3_92, %c0_93, %58] : memref<20x8x128xf32, #tpu.memory_space<vmem>>, vector<1x8x128xf32>
    %60 = vector.shape_cast %59 : vector<1x8x128xf32> to vector<8x128xf32>
    %61 = vector.broadcast %0 : f32 to vector<8x128xf32>
    %62 = arith.mulf %51, %61 : vector<8x128xf32>
    %63 = vector.broadcast %1 : f32 to vector<8x128xf32>
    %64 = arith.mulf %54, %63 : vector<8x128xf32>
    %65 = arith.addf %62, %64 : vector<8x128xf32>
    %66 = vector.broadcast %2 : f32 to vector<8x128xf32>
    %67 = arith.mulf %57, %66 : vector<8x128xf32>
    %68 = arith.addf %65, %67 : vector<8x128xf32>
    %69 = vector.broadcast %3 : f32 to vector<8x128xf32>
    %70 = arith.mulf %60, %69 : vector<8x128xf32>
    %71 = arith.addf %68, %70 : vector<8x128xf32>
    %72 = vector.broadcast %20 : f32 to vector<8x128xf32>
    %73 = arith.addf %71, %72 : vector<8x128xf32>
    %cst_94 = arith.constant 0.000000e+00 : f32
    %74 = vector.broadcast %cst_94 : f32 to vector<8x128xf32>
    %75 = arith.maximumf %73, %74 : vector<8x128xf32>
    %76 = vector.broadcast %4 : f32 to vector<8x128xf32>
    %77 = arith.mulf %51, %76 : vector<8x128xf32>
    %78 = vector.broadcast %5 : f32 to vector<8x128xf32>
    %79 = arith.mulf %54, %78 : vector<8x128xf32>
    %80 = arith.addf %77, %79 : vector<8x128xf32>
    %81 = vector.broadcast %6 : f32 to vector<8x128xf32>
    %82 = arith.mulf %57, %81 : vector<8x128xf32>
    %83 = arith.addf %80, %82 : vector<8x128xf32>
    %84 = vector.broadcast %7 : f32 to vector<8x128xf32>
    %85 = arith.mulf %60, %84 : vector<8x128xf32>
    %86 = arith.addf %83, %85 : vector<8x128xf32>
    %87 = vector.broadcast %21 : f32 to vector<8x128xf32>
    %88 = arith.addf %86, %87 : vector<8x128xf32>
    %cst_95 = arith.constant 0.000000e+00 : f32
    %89 = vector.broadcast %cst_95 : f32 to vector<8x128xf32>
    %90 = arith.maximumf %88, %89 : vector<8x128xf32>
    %91 = arith.addf %75, %90 : vector<8x128xf32>
    %92 = vector.broadcast %8 : f32 to vector<8x128xf32>
    %93 = arith.mulf %51, %92 : vector<8x128xf32>
    %94 = vector.broadcast %9 : f32 to vector<8x128xf32>
    %95 = arith.mulf %54, %94 : vector<8x128xf32>
    %96 = arith.addf %93, %95 : vector<8x128xf32>
    %97 = vector.broadcast %10 : f32 to vector<8x128xf32>
    %98 = arith.mulf %57, %97 : vector<8x128xf32>
    %99 = arith.addf %96, %98 : vector<8x128xf32>
    %100 = vector.broadcast %11 : f32 to vector<8x128xf32>
    %101 = arith.mulf %60, %100 : vector<8x128xf32>
    %102 = arith.addf %99, %101 : vector<8x128xf32>
    %103 = vector.broadcast %22 : f32 to vector<8x128xf32>
    %104 = arith.addf %102, %103 : vector<8x128xf32>
    %cst_96 = arith.constant 0.000000e+00 : f32
    %105 = vector.broadcast %cst_96 : f32 to vector<8x128xf32>
    %106 = arith.maximumf %104, %105 : vector<8x128xf32>
    %107 = arith.addf %91, %106 : vector<8x128xf32>
    %108 = vector.broadcast %12 : f32 to vector<8x128xf32>
    %109 = arith.mulf %51, %108 : vector<8x128xf32>
    %110 = vector.broadcast %13 : f32 to vector<8x128xf32>
    %111 = arith.mulf %54, %110 : vector<8x128xf32>
    %112 = arith.addf %109, %111 : vector<8x128xf32>
    %113 = vector.broadcast %14 : f32 to vector<8x128xf32>
    %114 = arith.mulf %57, %113 : vector<8x128xf32>
    %115 = arith.addf %112, %114 : vector<8x128xf32>
    %116 = vector.broadcast %15 : f32 to vector<8x128xf32>
    %117 = arith.mulf %60, %116 : vector<8x128xf32>
    %118 = arith.addf %115, %117 : vector<8x128xf32>
    %119 = vector.broadcast %23 : f32 to vector<8x128xf32>
    %120 = arith.addf %118, %119 : vector<8x128xf32>
    %cst_97 = arith.constant 0.000000e+00 : f32
    %121 = vector.broadcast %cst_97 : f32 to vector<8x128xf32>
    %122 = arith.maximumf %120, %121 : vector<8x128xf32>
    %123 = arith.addf %107, %122 : vector<8x128xf32>
    %124 = vector.broadcast %16 : f32 to vector<8x128xf32>
    %125 = arith.mulf %51, %124 : vector<8x128xf32>
    %126 = vector.broadcast %17 : f32 to vector<8x128xf32>
    %127 = arith.mulf %54, %126 : vector<8x128xf32>
    %128 = arith.addf %125, %127 : vector<8x128xf32>
    %129 = vector.broadcast %18 : f32 to vector<8x128xf32>
    %130 = arith.mulf %57, %129 : vector<8x128xf32>
    %131 = arith.addf %128, %130 : vector<8x128xf32>
    %132 = vector.broadcast %19 : f32 to vector<8x128xf32>
    %133 = arith.mulf %60, %132 : vector<8x128xf32>
    %134 = arith.addf %131, %133 : vector<8x128xf32>
    %135 = vector.broadcast %24 : f32 to vector<8x128xf32>
    %136 = arith.addf %134, %135 : vector<8x128xf32>
    %cst_98 = arith.constant 0.000000e+00 : f32
    %137 = vector.broadcast %cst_98 : f32 to vector<8x128xf32>
    %138 = arith.maximumf %136, %137 : vector<8x128xf32>
    %139 = arith.addf %123, %138 : vector<8x128xf32>
    %c4_99 = arith.constant 4 : index
    %c0_100 = arith.constant 0 : index
    %140 = arith.index_cast %48 : i32 to index
    %141 = vector.load %arg1[%c4_99, %c0_100, %140] : memref<20x8x128xf32, #tpu.memory_space<vmem>>, vector<1x8x128xf32>
    %142 = vector.shape_cast %141 : vector<1x8x128xf32> to vector<8x128xf32>
    %c5 = arith.constant 5 : index
    %c0_101 = arith.constant 0 : index
    %143 = arith.index_cast %48 : i32 to index
    %144 = vector.load %arg1[%c5, %c0_101, %143] : memref<20x8x128xf32, #tpu.memory_space<vmem>>, vector<1x8x128xf32>
    %145 = vector.shape_cast %144 : vector<1x8x128xf32> to vector<8x128xf32>
    %c6 = arith.constant 6 : index
    %c0_102 = arith.constant 0 : index
    %146 = arith.index_cast %48 : i32 to index
    %147 = vector.load %arg1[%c6, %c0_102, %146] : memref<20x8x128xf32, #tpu.memory_space<vmem>>, vector<1x8x128xf32>
    %148 = vector.shape_cast %147 : vector<1x8x128xf32> to vector<8x128xf32>
    %c7 = arith.constant 7 : index
    %c0_103 = arith.constant 0 : index
    %149 = arith.index_cast %48 : i32 to index
    %150 = vector.load %arg1[%c7, %c0_103, %149] : memref<20x8x128xf32, #tpu.memory_space<vmem>>, vector<1x8x128xf32>
    %151 = vector.shape_cast %150 : vector<1x8x128xf32> to vector<8x128xf32>
    %152 = vector.broadcast %0 : f32 to vector<8x128xf32>
    %153 = arith.mulf %142, %152 : vector<8x128xf32>
    %154 = vector.broadcast %1 : f32 to vector<8x128xf32>
    %155 = arith.mulf %145, %154 : vector<8x128xf32>
    %156 = arith.addf %153, %155 : vector<8x128xf32>
    %157 = vector.broadcast %2 : f32 to vector<8x128xf32>
    %158 = arith.mulf %148, %157 : vector<8x128xf32>
    %159 = arith.addf %156, %158 : vector<8x128xf32>
    %160 = vector.broadcast %3 : f32 to vector<8x128xf32>
    %161 = arith.mulf %151, %160 : vector<8x128xf32>
    %162 = arith.addf %159, %161 : vector<8x128xf32>
    %163 = vector.broadcast %25 : f32 to vector<8x128xf32>
    %164 = arith.addf %162, %163 : vector<8x128xf32>
    %cst_104 = arith.constant 0.000000e+00 : f32
    %165 = vector.broadcast %cst_104 : f32 to vector<8x128xf32>
    %166 = arith.maximumf %164, %165 : vector<8x128xf32>
    %167 = vector.broadcast %4 : f32 to vector<8x128xf32>
    %168 = arith.mulf %142, %167 : vector<8x128xf32>
    %169 = vector.broadcast %5 : f32 to vector<8x128xf32>
    %170 = arith.mulf %145, %169 : vector<8x128xf32>
    %171 = arith.addf %168, %170 : vector<8x128xf32>
    %172 = vector.broadcast %6 : f32 to vector<8x128xf32>
    %173 = arith.mulf %148, %172 : vector<8x128xf32>
    %174 = arith.addf %171, %173 : vector<8x128xf32>
    %175 = vector.broadcast %7 : f32 to vector<8x128xf32>
    %176 = arith.mulf %151, %175 : vector<8x128xf32>
    %177 = arith.addf %174, %176 : vector<8x128xf32>
    %178 = vector.broadcast %26 : f32 to vector<8x128xf32>
    %179 = arith.addf %177, %178 : vector<8x128xf32>
    %cst_105 = arith.constant 0.000000e+00 : f32
    %180 = vector.broadcast %cst_105 : f32 to vector<8x128xf32>
    %181 = arith.maximumf %179, %180 : vector<8x128xf32>
    %182 = arith.addf %166, %181 : vector<8x128xf32>
    %183 = vector.broadcast %8 : f32 to vector<8x128xf32>
    %184 = arith.mulf %142, %183 : vector<8x128xf32>
    %185 = vector.broadcast %9 : f32 to vector<8x128xf32>
    %186 = arith.mulf %145, %185 : vector<8x128xf32>
    %187 = arith.addf %184, %186 : vector<8x128xf32>
    %188 = vector.broadcast %10 : f32 to vector<8x128xf32>
    %189 = arith.mulf %148, %188 : vector<8x128xf32>
    %190 = arith.addf %187, %189 : vector<8x128xf32>
    %191 = vector.broadcast %11 : f32 to vector<8x128xf32>
    %192 = arith.mulf %151, %191 : vector<8x128xf32>
    %193 = arith.addf %190, %192 : vector<8x128xf32>
    %194 = vector.broadcast %27 : f32 to vector<8x128xf32>
    %195 = arith.addf %193, %194 : vector<8x128xf32>
    %cst_106 = arith.constant 0.000000e+00 : f32
    %196 = vector.broadcast %cst_106 : f32 to vector<8x128xf32>
    %197 = arith.maximumf %195, %196 : vector<8x128xf32>
    %198 = arith.addf %182, %197 : vector<8x128xf32>
    %199 = vector.broadcast %12 : f32 to vector<8x128xf32>
    %200 = arith.mulf %142, %199 : vector<8x128xf32>
    %201 = vector.broadcast %13 : f32 to vector<8x128xf32>
    %202 = arith.mulf %145, %201 : vector<8x128xf32>
    %203 = arith.addf %200, %202 : vector<8x128xf32>
    %204 = vector.broadcast %14 : f32 to vector<8x128xf32>
    %205 = arith.mulf %148, %204 : vector<8x128xf32>
    %206 = arith.addf %203, %205 : vector<8x128xf32>
    %207 = vector.broadcast %15 : f32 to vector<8x128xf32>
    %208 = arith.mulf %151, %207 : vector<8x128xf32>
    %209 = arith.addf %206, %208 : vector<8x128xf32>
    %210 = vector.broadcast %28 : f32 to vector<8x128xf32>
    %211 = arith.addf %209, %210 : vector<8x128xf32>
    %cst_107 = arith.constant 0.000000e+00 : f32
    %212 = vector.broadcast %cst_107 : f32 to vector<8x128xf32>
    %213 = arith.maximumf %211, %212 : vector<8x128xf32>
    %214 = arith.addf %198, %213 : vector<8x128xf32>
    %215 = vector.broadcast %16 : f32 to vector<8x128xf32>
    %216 = arith.mulf %142, %215 : vector<8x128xf32>
    %217 = vector.broadcast %17 : f32 to vector<8x128xf32>
    %218 = arith.mulf %145, %217 : vector<8x128xf32>
    %219 = arith.addf %216, %218 : vector<8x128xf32>
    %220 = vector.broadcast %18 : f32 to vector<8x128xf32>
    %221 = arith.mulf %148, %220 : vector<8x128xf32>
    %222 = arith.addf %219, %221 : vector<8x128xf32>
    %223 = vector.broadcast %19 : f32 to vector<8x128xf32>
    %224 = arith.mulf %151, %223 : vector<8x128xf32>
    %225 = arith.addf %222, %224 : vector<8x128xf32>
    %226 = vector.broadcast %29 : f32 to vector<8x128xf32>
    %227 = arith.addf %225, %226 : vector<8x128xf32>
    %cst_108 = arith.constant 0.000000e+00 : f32
    %228 = vector.broadcast %cst_108 : f32 to vector<8x128xf32>
    %229 = arith.maximumf %227, %228 : vector<8x128xf32>
    %230 = arith.addf %214, %229 : vector<8x128xf32>
    %231 = arith.cmpf ogt, %230, %139 : vector<8x128xf32>
    %232 = arith.cmpf ogt, %230, %45 : vector<8x128xf32>
    %233 = arith.cmpf ogt, %230, %45 : vector<8x128xf32>
    %234 = arith.select %233, %230, %45 : vector<8x128xi1>, vector<8x128xf32>
    %235 = arith.select %232, %45, %234 : vector<8x128xi1>, vector<8x128xf32>
    %c1_i32 = arith.constant 1 : i32
    %236 = vector.broadcast %c1_i32 : i32 to vector<8x128xi32>
    %237 = arith.select %233, %236, %46 : vector<8x128xi1>, vector<8x128xi32>
    %238 = arith.select %232, %46, %237 : vector<8x128xi1>, vector<8x128xi32>
    %239 = arith.select %232, %230, %45 : vector<8x128xi1>, vector<8x128xf32>
    %240 = arith.select %231, %139, %239 : vector<8x128xi1>, vector<8x128xf32>
    %c1_i32_109 = arith.constant 1 : i32
    %241 = vector.broadcast %c1_i32_109 : i32 to vector<8x128xi32>
    %242 = arith.select %232, %241, %46 : vector<8x128xi1>, vector<8x128xi32>
    %243 = arith.select %231, %46, %242 : vector<8x128xi1>, vector<8x128xi32>
    %244 = arith.select %231, %230, %139 : vector<8x128xi1>, vector<8x128xf32>
    %c1_i32_110 = arith.constant 1 : i32
    %245 = vector.broadcast %c1_i32_110 : i32 to vector<8x128xi32>
    %246 = arith.select %231, %245, %46 : vector<8x128xi1>, vector<8x128xi32>
    %c8 = arith.constant 8 : index
    %c0_111 = arith.constant 0 : index
    %247 = arith.index_cast %48 : i32 to index
    %248 = vector.load %arg1[%c8, %c0_111, %247] : memref<20x8x128xf32, #tpu.memory_space<vmem>>, vector<1x8x128xf32>
    %249 = vector.shape_cast %248 : vector<1x8x128xf32> to vector<8x128xf32>
    %c9 = arith.constant 9 : index
    %c0_112 = arith.constant 0 : index
    %250 = arith.index_cast %48 : i32 to index
    %251 = vector.load %arg1[%c9, %c0_112, %250] : memref<20x8x128xf32, #tpu.memory_space<vmem>>, vector<1x8x128xf32>
    %252 = vector.shape_cast %251 : vector<1x8x128xf32> to vector<8x128xf32>
    %c10 = arith.constant 10 : index
    %c0_113 = arith.constant 0 : index
    %253 = arith.index_cast %48 : i32 to index
    %254 = vector.load %arg1[%c10, %c0_113, %253] : memref<20x8x128xf32, #tpu.memory_space<vmem>>, vector<1x8x128xf32>
    %255 = vector.shape_cast %254 : vector<1x8x128xf32> to vector<8x128xf32>
    %c11 = arith.constant 11 : index
    %c0_114 = arith.constant 0 : index
    %256 = arith.index_cast %48 : i32 to index
    %257 = vector.load %arg1[%c11, %c0_114, %256] : memref<20x8x128xf32, #tpu.memory_space<vmem>>, vector<1x8x128xf32>
    %258 = vector.shape_cast %257 : vector<1x8x128xf32> to vector<8x128xf32>
    %259 = vector.broadcast %0 : f32 to vector<8x128xf32>
    %260 = arith.mulf %249, %259 : vector<8x128xf32>
    %261 = vector.broadcast %1 : f32 to vector<8x128xf32>
    %262 = arith.mulf %252, %261 : vector<8x128xf32>
    %263 = arith.addf %260, %262 : vector<8x128xf32>
    %264 = vector.broadcast %2 : f32 to vector<8x128xf32>
    %265 = arith.mulf %255, %264 : vector<8x128xf32>
    %266 = arith.addf %263, %265 : vector<8x128xf32>
    %267 = vector.broadcast %3 : f32 to vector<8x128xf32>
    %268 = arith.mulf %258, %267 : vector<8x128xf32>
    %269 = arith.addf %266, %268 : vector<8x128xf32>
    %270 = vector.broadcast %30 : f32 to vector<8x128xf32>
    %271 = arith.addf %269, %270 : vector<8x128xf32>
    %cst_115 = arith.constant 0.000000e+00 : f32
    %272 = vector.broadcast %cst_115 : f32 to vector<8x128xf32>
    %273 = arith.maximumf %271, %272 : vector<8x128xf32>
    %274 = vector.broadcast %4 : f32 to vector<8x128xf32>
    %275 = arith.mulf %249, %274 : vector<8x128xf32>
    %276 = vector.broadcast %5 : f32 to vector<8x128xf32>
    %277 = arith.mulf %252, %276 : vector<8x128xf32>
    %278 = arith.addf %275, %277 : vector<8x128xf32>
    %279 = vector.broadcast %6 : f32 to vector<8x128xf32>
    %280 = arith.mulf %255, %279 : vector<8x128xf32>
    %281 = arith.addf %278, %280 : vector<8x128xf32>
    %282 = vector.broadcast %7 : f32 to vector<8x128xf32>
    %283 = arith.mulf %258, %282 : vector<8x128xf32>
    %284 = arith.addf %281, %283 : vector<8x128xf32>
    %285 = vector.broadcast %31 : f32 to vector<8x128xf32>
    %286 = arith.addf %284, %285 : vector<8x128xf32>
    %cst_116 = arith.constant 0.000000e+00 : f32
    %287 = vector.broadcast %cst_116 : f32 to vector<8x128xf32>
    %288 = arith.maximumf %286, %287 : vector<8x128xf32>
    %289 = arith.addf %273, %288 : vector<8x128xf32>
    %290 = vector.broadcast %8 : f32 to vector<8x128xf32>
    %291 = arith.mulf %249, %290 : vector<8x128xf32>
    %292 = vector.broadcast %9 : f32 to vector<8x128xf32>
    %293 = arith.mulf %252, %292 : vector<8x128xf32>
    %294 = arith.addf %291, %293 : vector<8x128xf32>
    %295 = vector.broadcast %10 : f32 to vector<8x128xf32>
    %296 = arith.mulf %255, %295 : vector<8x128xf32>
    %297 = arith.addf %294, %296 : vector<8x128xf32>
    %298 = vector.broadcast %11 : f32 to vector<8x128xf32>
    %299 = arith.mulf %258, %298 : vector<8x128xf32>
    %300 = arith.addf %297, %299 : vector<8x128xf32>
    %301 = vector.broadcast %32 : f32 to vector<8x128xf32>
    %302 = arith.addf %300, %301 : vector<8x128xf32>
    %cst_117 = arith.constant 0.000000e+00 : f32
    %303 = vector.broadcast %cst_117 : f32 to vector<8x128xf32>
    %304 = arith.maximumf %302, %303 : vector<8x128xf32>
    %305 = arith.addf %289, %304 : vector<8x128xf32>
    %306 = vector.broadcast %12 : f32 to vector<8x128xf32>
    %307 = arith.mulf %249, %306 : vector<8x128xf32>
    %308 = vector.broadcast %13 : f32 to vector<8x128xf32>
    %309 = arith.mulf %252, %308 : vector<8x128xf32>
    %310 = arith.addf %307, %309 : vector<8x128xf32>
    %311 = vector.broadcast %14 : f32 to vector<8x128xf32>
    %312 = arith.mulf %255, %311 : vector<8x128xf32>
    %313 = arith.addf %310, %312 : vector<8x128xf32>
    %314 = vector.broadcast %15 : f32 to vector<8x128xf32>
    %315 = arith.mulf %258, %314 : vector<8x128xf32>
    %316 = arith.addf %313, %315 : vector<8x128xf32>
    %317 = vector.broadcast %33 : f32 to vector<8x128xf32>
    %318 = arith.addf %316, %317 : vector<8x128xf32>
    %cst_118 = arith.constant 0.000000e+00 : f32
    %319 = vector.broadcast %cst_118 : f32 to vector<8x128xf32>
    %320 = arith.maximumf %318, %319 : vector<8x128xf32>
    %321 = arith.addf %305, %320 : vector<8x128xf32>
    %322 = vector.broadcast %16 : f32 to vector<8x128xf32>
    %323 = arith.mulf %249, %322 : vector<8x128xf32>
    %324 = vector.broadcast %17 : f32 to vector<8x128xf32>
    %325 = arith.mulf %252, %324 : vector<8x128xf32>
    %326 = arith.addf %323, %325 : vector<8x128xf32>
    %327 = vector.broadcast %18 : f32 to vector<8x128xf32>
    %328 = arith.mulf %255, %327 : vector<8x128xf32>
    %329 = arith.addf %326, %328 : vector<8x128xf32>
    %330 = vector.broadcast %19 : f32 to vector<8x128xf32>
    %331 = arith.mulf %258, %330 : vector<8x128xf32>
    %332 = arith.addf %329, %331 : vector<8x128xf32>
    %333 = vector.broadcast %34 : f32 to vector<8x128xf32>
    %334 = arith.addf %332, %333 : vector<8x128xf32>
    %cst_119 = arith.constant 0.000000e+00 : f32
    %335 = vector.broadcast %cst_119 : f32 to vector<8x128xf32>
    %336 = arith.maximumf %334, %335 : vector<8x128xf32>
    %337 = arith.addf %321, %336 : vector<8x128xf32>
    %338 = arith.cmpf ogt, %337, %244 : vector<8x128xf32>
    %339 = arith.cmpf ogt, %337, %240 : vector<8x128xf32>
    %340 = arith.cmpf ogt, %337, %235 : vector<8x128xf32>
    %341 = arith.select %340, %337, %235 : vector<8x128xi1>, vector<8x128xf32>
    %342 = arith.select %339, %240, %341 : vector<8x128xi1>, vector<8x128xf32>
    %c2_i32 = arith.constant 2 : i32
    %343 = vector.broadcast %c2_i32 : i32 to vector<8x128xi32>
    %344 = arith.select %340, %343, %238 : vector<8x128xi1>, vector<8x128xi32>
    %345 = arith.select %339, %243, %344 : vector<8x128xi1>, vector<8x128xi32>
    %346 = arith.select %339, %337, %240 : vector<8x128xi1>, vector<8x128xf32>
    %347 = arith.select %338, %244, %346 : vector<8x128xi1>, vector<8x128xf32>
    %c2_i32_120 = arith.constant 2 : i32
    %348 = vector.broadcast %c2_i32_120 : i32 to vector<8x128xi32>
    %349 = arith.select %339, %348, %243 : vector<8x128xi1>, vector<8x128xi32>
    %350 = arith.select %338, %246, %349 : vector<8x128xi1>, vector<8x128xi32>
    %351 = arith.select %338, %337, %244 : vector<8x128xi1>, vector<8x128xf32>
    %c2_i32_121 = arith.constant 2 : i32
    %352 = vector.broadcast %c2_i32_121 : i32 to vector<8x128xi32>
    %353 = arith.select %338, %352, %246 : vector<8x128xi1>, vector<8x128xi32>
    %c12 = arith.constant 12 : index
    %c0_122 = arith.constant 0 : index
    %354 = arith.index_cast %48 : i32 to index
    %355 = vector.load %arg1[%c12, %c0_122, %354] : memref<20x8x128xf32, #tpu.memory_space<vmem>>, vector<1x8x128xf32>
    %356 = vector.shape_cast %355 : vector<1x8x128xf32> to vector<8x128xf32>
    %c13 = arith.constant 13 : index
    %c0_123 = arith.constant 0 : index
    %357 = arith.index_cast %48 : i32 to index
    %358 = vector.load %arg1[%c13, %c0_123, %357] : memref<20x8x128xf32, #tpu.memory_space<vmem>>, vector<1x8x128xf32>
    %359 = vector.shape_cast %358 : vector<1x8x128xf32> to vector<8x128xf32>
    %c14 = arith.constant 14 : index
    %c0_124 = arith.constant 0 : index
    %360 = arith.index_cast %48 : i32 to index
    %361 = vector.load %arg1[%c14, %c0_124, %360] : memref<20x8x128xf32, #tpu.memory_space<vmem>>, vector<1x8x128xf32>
    %362 = vector.shape_cast %361 : vector<1x8x128xf32> to vector<8x128xf32>
    %c15 = arith.constant 15 : index
    %c0_125 = arith.constant 0 : index
    %363 = arith.index_cast %48 : i32 to index
    %364 = vector.load %arg1[%c15, %c0_125, %363] : memref<20x8x128xf32, #tpu.memory_space<vmem>>, vector<1x8x128xf32>
    %365 = vector.shape_cast %364 : vector<1x8x128xf32> to vector<8x128xf32>
    %366 = vector.broadcast %0 : f32 to vector<8x128xf32>
    %367 = arith.mulf %356, %366 : vector<8x128xf32>
    %368 = vector.broadcast %1 : f32 to vector<8x128xf32>
    %369 = arith.mulf %359, %368 : vector<8x128xf32>
    %370 = arith.addf %367, %369 : vector<8x128xf32>
    %371 = vector.broadcast %2 : f32 to vector<8x128xf32>
    %372 = arith.mulf %362, %371 : vector<8x128xf32>
    %373 = arith.addf %370, %372 : vector<8x128xf32>
    %374 = vector.broadcast %3 : f32 to vector<8x128xf32>
    %375 = arith.mulf %365, %374 : vector<8x128xf32>
    %376 = arith.addf %373, %375 : vector<8x128xf32>
    %377 = vector.broadcast %35 : f32 to vector<8x128xf32>
    %378 = arith.addf %376, %377 : vector<8x128xf32>
    %cst_126 = arith.constant 0.000000e+00 : f32
    %379 = vector.broadcast %cst_126 : f32 to vector<8x128xf32>
    %380 = arith.maximumf %378, %379 : vector<8x128xf32>
    %381 = vector.broadcast %4 : f32 to vector<8x128xf32>
    %382 = arith.mulf %356, %381 : vector<8x128xf32>
    %383 = vector.broadcast %5 : f32 to vector<8x128xf32>
    %384 = arith.mulf %359, %383 : vector<8x128xf32>
    %385 = arith.addf %382, %384 : vector<8x128xf32>
    %386 = vector.broadcast %6 : f32 to vector<8x128xf32>
    %387 = arith.mulf %362, %386 : vector<8x128xf32>
    %388 = arith.addf %385, %387 : vector<8x128xf32>
    %389 = vector.broadcast %7 : f32 to vector<8x128xf32>
    %390 = arith.mulf %365, %389 : vector<8x128xf32>
    %391 = arith.addf %388, %390 : vector<8x128xf32>
    %392 = vector.broadcast %36 : f32 to vector<8x128xf32>
    %393 = arith.addf %391, %392 : vector<8x128xf32>
    %cst_127 = arith.constant 0.000000e+00 : f32
    %394 = vector.broadcast %cst_127 : f32 to vector<8x128xf32>
    %395 = arith.maximumf %393, %394 : vector<8x128xf32>
    %396 = arith.addf %380, %395 : vector<8x128xf32>
    %397 = vector.broadcast %8 : f32 to vector<8x128xf32>
    %398 = arith.mulf %356, %397 : vector<8x128xf32>
    %399 = vector.broadcast %9 : f32 to vector<8x128xf32>
    %400 = arith.mulf %359, %399 : vector<8x128xf32>
    %401 = arith.addf %398, %400 : vector<8x128xf32>
    %402 = vector.broadcast %10 : f32 to vector<8x128xf32>
    %403 = arith.mulf %362, %402 : vector<8x128xf32>
    %404 = arith.addf %401, %403 : vector<8x128xf32>
    %405 = vector.broadcast %11 : f32 to vector<8x128xf32>
    %406 = arith.mulf %365, %405 : vector<8x128xf32>
    %407 = arith.addf %404, %406 : vector<8x128xf32>
    %408 = vector.broadcast %37 : f32 to vector<8x128xf32>
    %409 = arith.addf %407, %408 : vector<8x128xf32>
    %cst_128 = arith.constant 0.000000e+00 : f32
    %410 = vector.broadcast %cst_128 : f32 to vector<8x128xf32>
    %411 = arith.maximumf %409, %410 : vector<8x128xf32>
    %412 = arith.addf %396, %411 : vector<8x128xf32>
    %413 = vector.broadcast %12 : f32 to vector<8x128xf32>
    %414 = arith.mulf %356, %413 : vector<8x128xf32>
    %415 = vector.broadcast %13 : f32 to vector<8x128xf32>
    %416 = arith.mulf %359, %415 : vector<8x128xf32>
    %417 = arith.addf %414, %416 : vector<8x128xf32>
    %418 = vector.broadcast %14 : f32 to vector<8x128xf32>
    %419 = arith.mulf %362, %418 : vector<8x128xf32>
    %420 = arith.addf %417, %419 : vector<8x128xf32>
    %421 = vector.broadcast %15 : f32 to vector<8x128xf32>
    %422 = arith.mulf %365, %421 : vector<8x128xf32>
    %423 = arith.addf %420, %422 : vector<8x128xf32>
    %424 = vector.broadcast %38 : f32 to vector<8x128xf32>
    %425 = arith.addf %423, %424 : vector<8x128xf32>
    %cst_129 = arith.constant 0.000000e+00 : f32
    %426 = vector.broadcast %cst_129 : f32 to vector<8x128xf32>
    %427 = arith.maximumf %425, %426 : vector<8x128xf32>
    %428 = arith.addf %412, %427 : vector<8x128xf32>
    %429 = vector.broadcast %16 : f32 to vector<8x128xf32>
    %430 = arith.mulf %356, %429 : vector<8x128xf32>
    %431 = vector.broadcast %17 : f32 to vector<8x128xf32>
    %432 = arith.mulf %359, %431 : vector<8x128xf32>
    %433 = arith.addf %430, %432 : vector<8x128xf32>
    %434 = vector.broadcast %18 : f32 to vector<8x128xf32>
    %435 = arith.mulf %362, %434 : vector<8x128xf32>
    %436 = arith.addf %433, %435 : vector<8x128xf32>
    %437 = vector.broadcast %19 : f32 to vector<8x128xf32>
    %438 = arith.mulf %365, %437 : vector<8x128xf32>
    %439 = arith.addf %436, %438 : vector<8x128xf32>
    %440 = vector.broadcast %39 : f32 to vector<8x128xf32>
    %441 = arith.addf %439, %440 : vector<8x128xf32>
    %cst_130 = arith.constant 0.000000e+00 : f32
    %442 = vector.broadcast %cst_130 : f32 to vector<8x128xf32>
    %443 = arith.maximumf %441, %442 : vector<8x128xf32>
    %444 = arith.addf %428, %443 : vector<8x128xf32>
    %445 = arith.cmpf ogt, %444, %351 : vector<8x128xf32>
    %446 = arith.cmpf ogt, %444, %347 : vector<8x128xf32>
    %447 = arith.cmpf ogt, %444, %342 : vector<8x128xf32>
    %448 = arith.select %447, %444, %342 : vector<8x128xi1>, vector<8x128xf32>
    %449 = arith.select %446, %347, %448 : vector<8x128xi1>, vector<8x128xf32>
    %c3_i32 = arith.constant 3 : i32
    %450 = vector.broadcast %c3_i32 : i32 to vector<8x128xi32>
    %451 = arith.select %447, %450, %345 : vector<8x128xi1>, vector<8x128xi32>
    %452 = arith.select %446, %350, %451 : vector<8x128xi1>, vector<8x128xi32>
    %453 = arith.select %446, %444, %347 : vector<8x128xi1>, vector<8x128xf32>
    %454 = arith.select %445, %351, %453 : vector<8x128xi1>, vector<8x128xf32>
    %c3_i32_131 = arith.constant 3 : i32
    %455 = vector.broadcast %c3_i32_131 : i32 to vector<8x128xi32>
    %456 = arith.select %446, %455, %350 : vector<8x128xi1>, vector<8x128xi32>
    %457 = arith.select %445, %353, %456 : vector<8x128xi1>, vector<8x128xi32>
    %458 = arith.select %445, %444, %351 : vector<8x128xi1>, vector<8x128xf32>
    %c3_i32_132 = arith.constant 3 : i32
    %459 = vector.broadcast %c3_i32_132 : i32 to vector<8x128xi32>
    %460 = arith.select %445, %459, %353 : vector<8x128xi1>, vector<8x128xi32>
    %c16 = arith.constant 16 : index
    %c0_133 = arith.constant 0 : index
    %461 = arith.index_cast %48 : i32 to index
    %462 = vector.load %arg1[%c16, %c0_133, %461] : memref<20x8x128xf32, #tpu.memory_space<vmem>>, vector<1x8x128xf32>
    %463 = vector.shape_cast %462 : vector<1x8x128xf32> to vector<8x128xf32>
    %c17 = arith.constant 17 : index
    %c0_134 = arith.constant 0 : index
    %464 = arith.index_cast %48 : i32 to index
    %465 = vector.load %arg1[%c17, %c0_134, %464] : memref<20x8x128xf32, #tpu.memory_space<vmem>>, vector<1x8x128xf32>
    %466 = vector.shape_cast %465 : vector<1x8x128xf32> to vector<8x128xf32>
    %c18 = arith.constant 18 : index
    %c0_135 = arith.constant 0 : index
    %467 = arith.index_cast %48 : i32 to index
    %468 = vector.load %arg1[%c18, %c0_135, %467] : memref<20x8x128xf32, #tpu.memory_space<vmem>>, vector<1x8x128xf32>
    %469 = vector.shape_cast %468 : vector<1x8x128xf32> to vector<8x128xf32>
    %c19 = arith.constant 19 : index
    %c0_136 = arith.constant 0 : index
    %470 = arith.index_cast %48 : i32 to index
    %471 = vector.load %arg1[%c19, %c0_136, %470] : memref<20x8x128xf32, #tpu.memory_space<vmem>>, vector<1x8x128xf32>
    %472 = vector.shape_cast %471 : vector<1x8x128xf32> to vector<8x128xf32>
    %473 = vector.broadcast %0 : f32 to vector<8x128xf32>
    %474 = arith.mulf %463, %473 : vector<8x128xf32>
    %475 = vector.broadcast %1 : f32 to vector<8x128xf32>
    %476 = arith.mulf %466, %475 : vector<8x128xf32>
    %477 = arith.addf %474, %476 : vector<8x128xf32>
    %478 = vector.broadcast %2 : f32 to vector<8x128xf32>
    %479 = arith.mulf %469, %478 : vector<8x128xf32>
    %480 = arith.addf %477, %479 : vector<8x128xf32>
    %481 = vector.broadcast %3 : f32 to vector<8x128xf32>
    %482 = arith.mulf %472, %481 : vector<8x128xf32>
    %483 = arith.addf %480, %482 : vector<8x128xf32>
    %484 = vector.broadcast %40 : f32 to vector<8x128xf32>
    %485 = arith.addf %483, %484 : vector<8x128xf32>
    %cst_137 = arith.constant 0.000000e+00 : f32
    %486 = vector.broadcast %cst_137 : f32 to vector<8x128xf32>
    %487 = arith.maximumf %485, %486 : vector<8x128xf32>
    %488 = vector.broadcast %4 : f32 to vector<8x128xf32>
    %489 = arith.mulf %463, %488 : vector<8x128xf32>
    %490 = vector.broadcast %5 : f32 to vector<8x128xf32>
    %491 = arith.mulf %466, %490 : vector<8x128xf32>
    %492 = arith.addf %489, %491 : vector<8x128xf32>
    %493 = vector.broadcast %6 : f32 to vector<8x128xf32>
    %494 = arith.mulf %469, %493 : vector<8x128xf32>
    %495 = arith.addf %492, %494 : vector<8x128xf32>
    %496 = vector.broadcast %7 : f32 to vector<8x128xf32>
    %497 = arith.mulf %472, %496 : vector<8x128xf32>
    %498 = arith.addf %495, %497 : vector<8x128xf32>
    %499 = vector.broadcast %41 : f32 to vector<8x128xf32>
    %500 = arith.addf %498, %499 : vector<8x128xf32>
    %cst_138 = arith.constant 0.000000e+00 : f32
    %501 = vector.broadcast %cst_138 : f32 to vector<8x128xf32>
    %502 = arith.maximumf %500, %501 : vector<8x128xf32>
    %503 = arith.addf %487, %502 : vector<8x128xf32>
    %504 = vector.broadcast %8 : f32 to vector<8x128xf32>
    %505 = arith.mulf %463, %504 : vector<8x128xf32>
    %506 = vector.broadcast %9 : f32 to vector<8x128xf32>
    %507 = arith.mulf %466, %506 : vector<8x128xf32>
    %508 = arith.addf %505, %507 : vector<8x128xf32>
    %509 = vector.broadcast %10 : f32 to vector<8x128xf32>
    %510 = arith.mulf %469, %509 : vector<8x128xf32>
    %511 = arith.addf %508, %510 : vector<8x128xf32>
    %512 = vector.broadcast %11 : f32 to vector<8x128xf32>
    %513 = arith.mulf %472, %512 : vector<8x128xf32>
    %514 = arith.addf %511, %513 : vector<8x128xf32>
    %515 = vector.broadcast %42 : f32 to vector<8x128xf32>
    %516 = arith.addf %514, %515 : vector<8x128xf32>
    %cst_139 = arith.constant 0.000000e+00 : f32
    %517 = vector.broadcast %cst_139 : f32 to vector<8x128xf32>
    %518 = arith.maximumf %516, %517 : vector<8x128xf32>
    %519 = arith.addf %503, %518 : vector<8x128xf32>
    %520 = vector.broadcast %12 : f32 to vector<8x128xf32>
    %521 = arith.mulf %463, %520 : vector<8x128xf32>
    %522 = vector.broadcast %13 : f32 to vector<8x128xf32>
    %523 = arith.mulf %466, %522 : vector<8x128xf32>
    %524 = arith.addf %521, %523 : vector<8x128xf32>
    %525 = vector.broadcast %14 : f32 to vector<8x128xf32>
    %526 = arith.mulf %469, %525 : vector<8x128xf32>
    %527 = arith.addf %524, %526 : vector<8x128xf32>
    %528 = vector.broadcast %15 : f32 to vector<8x128xf32>
    %529 = arith.mulf %472, %528 : vector<8x128xf32>
    %530 = arith.addf %527, %529 : vector<8x128xf32>
    %531 = vector.broadcast %43 : f32 to vector<8x128xf32>
    %532 = arith.addf %530, %531 : vector<8x128xf32>
    %cst_140 = arith.constant 0.000000e+00 : f32
    %533 = vector.broadcast %cst_140 : f32 to vector<8x128xf32>
    %534 = arith.maximumf %532, %533 : vector<8x128xf32>
    %535 = arith.addf %519, %534 : vector<8x128xf32>
    %536 = vector.broadcast %16 : f32 to vector<8x128xf32>
    %537 = arith.mulf %463, %536 : vector<8x128xf32>
    %538 = vector.broadcast %17 : f32 to vector<8x128xf32>
    %539 = arith.mulf %466, %538 : vector<8x128xf32>
    %540 = arith.addf %537, %539 : vector<8x128xf32>
    %541 = vector.broadcast %18 : f32 to vector<8x128xf32>
    %542 = arith.mulf %469, %541 : vector<8x128xf32>
    %543 = arith.addf %540, %542 : vector<8x128xf32>
    %544 = vector.broadcast %19 : f32 to vector<8x128xf32>
    %545 = arith.mulf %472, %544 : vector<8x128xf32>
    %546 = arith.addf %543, %545 : vector<8x128xf32>
    %547 = vector.broadcast %44 : f32 to vector<8x128xf32>
    %548 = arith.addf %546, %547 : vector<8x128xf32>
    %cst_141 = arith.constant 0.000000e+00 : f32
    %549 = vector.broadcast %cst_141 : f32 to vector<8x128xf32>
    %550 = arith.maximumf %548, %549 : vector<8x128xf32>
    %551 = arith.addf %535, %550 : vector<8x128xf32>
    %552 = arith.cmpf ogt, %551, %458 : vector<8x128xf32>
    %553 = arith.cmpf ogt, %551, %454 : vector<8x128xf32>
    %554 = arith.cmpf ogt, %551, %449 : vector<8x128xf32>
    %555 = arith.select %554, %551, %449 : vector<8x128xi1>, vector<8x128xf32>
    %556 = arith.select %553, %454, %555 : vector<8x128xi1>, vector<8x128xf32>
    %c4_i32 = arith.constant 4 : i32
    %557 = vector.broadcast %c4_i32 : i32 to vector<8x128xi32>
    %558 = arith.select %554, %557, %452 : vector<8x128xi1>, vector<8x128xi32>
    %559 = arith.select %553, %457, %558 : vector<8x128xi1>, vector<8x128xi32>
    %560 = arith.select %553, %551, %454 : vector<8x128xi1>, vector<8x128xf32>
    %561 = arith.select %552, %458, %560 : vector<8x128xi1>, vector<8x128xf32>
    %c4_i32_142 = arith.constant 4 : i32
    %562 = vector.broadcast %c4_i32_142 : i32 to vector<8x128xi32>
    %563 = arith.select %553, %562, %457 : vector<8x128xi1>, vector<8x128xi32>
    %564 = arith.select %552, %460, %563 : vector<8x128xi1>, vector<8x128xi32>
    %565 = arith.select %552, %551, %458 : vector<8x128xi1>, vector<8x128xf32>
    %c4_i32_143 = arith.constant 4 : i32
    %566 = vector.broadcast %c4_i32_143 : i32 to vector<8x128xi32>
    %567 = arith.select %552, %566, %460 : vector<8x128xi1>, vector<8x128xi32>
    %c0_144 = arith.constant 0 : index
    %c0_145 = arith.constant 0 : index
    %568 = arith.index_cast %48 : i32 to index
    %569 = vector.load %arg4[%c0_144, %c0_145, %568] : memref<3x8x128xf32, #tpu.memory_space<vmem>>, vector<1x8x128xf32>
    %570 = vector.shape_cast %569 : vector<1x8x128xf32> to vector<8x128xf32>
    %571 = vector.shape_cast %565 : vector<8x128xf32> to vector<1x8x128xf32>
    tpu.vector_store %arg4[%c0_144, %c0_145, %568], %571 {strides = array<i32>} : memref<3x8x128xf32, #tpu.memory_space<vmem>>, vector<1x8x128xf32>,
    %c1_146 = arith.constant 1 : index
    %c0_147 = arith.constant 0 : index
    %572 = arith.index_cast %48 : i32 to index
    %573 = vector.load %arg4[%c1_146, %c0_147, %572] : memref<3x8x128xf32, #tpu.memory_space<vmem>>, vector<1x8x128xf32>
    %574 = vector.shape_cast %573 : vector<1x8x128xf32> to vector<8x128xf32>
    %575 = vector.shape_cast %561 : vector<8x128xf32> to vector<1x8x128xf32>
    tpu.vector_store %arg4[%c1_146, %c0_147, %572], %575 {strides = array<i32>} : memref<3x8x128xf32, #tpu.memory_space<vmem>>, vector<1x8x128xf32>,
    %c2_148 = arith.constant 2 : index
    %c0_149 = arith.constant 0 : index
    %576 = arith.index_cast %48 : i32 to index
    %577 = vector.load %arg4[%c2_148, %c0_149, %576] : memref<3x8x128xf32, #tpu.memory_space<vmem>>, vector<1x8x128xf32>
    %578 = vector.shape_cast %577 : vector<1x8x128xf32> to vector<8x128xf32>
    %579 = vector.shape_cast %556 : vector<8x128xf32> to vector<1x8x128xf32>
    tpu.vector_store %arg4[%c2_148, %c0_149, %576], %579 {strides = array<i32>} : memref<3x8x128xf32, #tpu.memory_space<vmem>>, vector<1x8x128xf32>,
    %c0_150 = arith.constant 0 : index
    %c0_151 = arith.constant 0 : index
    %580 = arith.index_cast %48 : i32 to index
    %581 = vector.load %arg5[%c0_150, %c0_151, %580] : memref<3x8x128xi32, #tpu.memory_space<vmem>>, vector<1x8x128xi32>
    %582 = vector.shape_cast %581 : vector<1x8x128xi32> to vector<8x128xi32>
    %583 = vector.shape_cast %567 : vector<8x128xi32> to vector<1x8x128xi32>
    tpu.vector_store %arg5[%c0_150, %c0_151, %580], %583 {strides = array<i32>} : memref<3x8x128xi32, #tpu.memory_space<vmem>>, vector<1x8x128xi32>,
    %c1_152 = arith.constant 1 : index
    %c0_153 = arith.constant 0 : index
    %584 = arith.index_cast %48 : i32 to index
    %585 = vector.load %arg5[%c1_152, %c0_153, %584] : memref<3x8x128xi32, #tpu.memory_space<vmem>>, vector<1x8x128xi32>
    %586 = vector.shape_cast %585 : vector<1x8x128xi32> to vector<8x128xi32>
    %587 = vector.shape_cast %564 : vector<8x128xi32> to vector<1x8x128xi32>
    tpu.vector_store %arg5[%c1_152, %c0_153, %584], %587 {strides = array<i32>} : memref<3x8x128xi32, #tpu.memory_space<vmem>>, vector<1x8x128xi32>,
    %c2_154 = arith.constant 2 : index
    %c0_155 = arith.constant 0 : index
    %588 = arith.index_cast %48 : i32 to index
    %589 = vector.load %arg5[%c2_154, %c0_155, %588] : memref<3x8x128xi32, #tpu.memory_space<vmem>>, vector<1x8x128xi32>
    %590 = vector.shape_cast %589 : vector<1x8x128xi32> to vector<8x128xi32>
    %591 = vector.shape_cast %559 : vector<8x128xi32> to vector<1x8x128xi32>
    tpu.vector_store %arg5[%c2_154, %c0_155, %588], %591 {strides = array<i32>} : memref<3x8x128xi32, #tpu.memory_space<vmem>>, vector<1x8x128xi32>,
    %c1_i32_156 = arith.constant 1 : i32
    return
  }
  func.func @transform_0(%arg0: i32) -> (i32, i32, i32) {
    %c0_i32 = arith.constant 0 : i32
    %c0_i32_0 = arith.constant 0 : i32
    %c0_i32_1 = arith.constant 0 : i32
    return %c0_i32, %c0_i32_0, %arg0 : i32, i32, i32
  }
  func.func @transform_1(%arg0: i32) -> (i32, i32) {
    %c0_i32 = arith.constant 0 : i32
    %c0_i32_0 = arith.constant 0 : i32
    %c0_i32_1 = arith.constant 0 : i32
    return %c0_i32, %c0_i32_0 : i32, i32
  }
  func.func @transform_2(%arg0: i32) -> (i32, i32) {
    %c0_i32 = arith.constant 0 : i32
    %c0_i32_0 = arith.constant 0 : i32
    %c0_i32_1 = arith.constant 0 : i32
    return %c0_i32, %c0_i32_0 : i32, i32
  }
  func.func @transform_3(%arg0: i32) -> (i32, i32, i32) {
    %c0_i32 = arith.constant 0 : i32
    %c0_i32_0 = arith.constant 0 : i32
    %c0_i32_1 = arith.constant 0 : i32
    return %c0_i32, %c0_i32_0, %arg0 : i32, i32, i32
  }
  func.func @transform_4(%arg0: i32) -> (i32, i32, i32) {
    %c0_i32 = arith.constant 0 : i32
    %c0_i32_0 = arith.constant 0 : i32
    %c0_i32_1 = arith.constant 0 : i32
    return %c0_i32, %c0_i32_0, %arg0 : i32, i32, i32
  }
}

</mosaic_0001>

<llo_original>
// kernel: tpu_custom_call.1
$region0: #{tpu_custom_call.1}
  #allocation0 [shape = 'u32[]', space=smem, size = 0x4, offset = 0x4, fixed_abs, tag = 'smem constant byte address 0x4 - core index']
  #allocation1 [shape = 'u32[144,128]{1,0:T(1,128)}', space=vmem, size = 0x12000, scoped, tag = 'internal scratch']
  %s0 = inlined_call_operand.hbm [shape: f32[20,8,128], index: 0, kind: input, shape index: {}]
  %s1 = inlined_call_operand.vmem [shape: f32[5,4], index: 1, kind: input, shape index: {}]
  %s2 = inlined_call_operand.vmem [shape: f32[5,5], index: 2, kind: input, shape index: {}]
  %s3 = inlined_call_operand.hbm [shape: f32[3,8,128], index: 3, kind: output, shape index: {0}]
  %s4 = inlined_call_operand.hbm [shape: s32[3,8,128], index: 4, kind: output, shape index: {1}]
  %5 = xla_tuple %s3, %s4
  %s6 = sld [smem:[#allocation0]]
  $region42: #{tpu_custom_call.1} parent=0
    _
  %s8 = ssub.s32 1, %s6
  %s9 = scalar_select 0, %s8, %s6
  $region1: #{tpu_custom_call.1} parent=0
    #allocation2 [shape = 'u8[81920]{0}', space=vmem, size = 0x14000, scoped, tag = 'input window, operand 0, single buffered']
    #allocation3 [shape = 's32[1]{0}', space=sflag, size = 0x4, scoped, tag = 'scoped memory for tpu_custom_call.1']
    #allocation4 [shape = 's32[1]{0}', space=sflag, size = 0x4, scoped, tag = 'scoped memory for tpu_custom_call.1']
    #allocation5 [shape = 's32[1]{0}', space=sflag, size = 0x4, scoped, tag = 'scoped memory for tpu_custom_call.1']
    #allocation6 [shape = 'u8[4096]{0}', space=smem, size = 0x1000, scoped, tag = 'input window, operand 1, single buffered']
    #allocation7 [shape = 'u8[4096]{0}', space=smem, size = 0x1000, scoped, tag = 'input window, operand 2, single buffered']
    #allocation8 [shape = 's32[1]{0}', space=sflag, size = 0x4, scoped, tag = 'scoped memory for tpu_custom_call.1']
    #allocation9 [shape = 'u8[12288]{0}', space=vmem, size = 0x3000, scoped, tag = 'output window, operand 0, single buffered']
    #allocation10 [shape = 'u8[12288]{0}', space=vmem, size = 0x3000, scoped, tag = 'output window, operand 1, single buffered']
    #allocation11 [shape = 's32[1]{0}', space=sflag, size = 0x4, scoped, tag = 'scoped memory for tpu_custom_call.1']
    %10 = vsyncpa [#allocation3], 0
    %11 = vsyncpa [#allocation5], 0
    %12 = vsyncpa [#allocation8], 0
    %13 = vsyncpa [#allocation4], 0
    %14 = vsyncpa [#allocation11], 0
    // Predicated region
    $region2: #{tpu_custom_call.1} parent=1 // pred_check
      _
    $region3: #{tpu_custom_call.1} parent=1 // pred_check_branch
      %16 = sbr.rel (0) target = $region5
    $region4: #{tpu_custom_call.1} parent=1 // pred_region
      %s18 = ssub.s32 2560, 2560
      %19 = vsyncadd [#allocation3], %s18
      %s20 = sshll.u32 [#allocation2], 4
      %s21 = int_to_ptr.vmem [resolvable:$true] %s20
      %26 = dma.hbm_to_vmem [thread:$0]  %s0, 2560, %s21, [#allocation3], 128, 128, 8
    $region5: #{tpu_custom_call.1} parent=1 // pred_fallthru
      _
    // Predicated region
    $region6: #{tpu_custom_call.1} parent=1 // pred_check
      _
    $region7: #{tpu_custom_call.1} parent=1 // pred_check_branch
      %28 = sbr.rel (0) target = $region9
    $region8: #{tpu_custom_call.1} parent=1 // pred_region
      %s30 = ssub.s32 128, 128
      %31 = vsyncadd [#allocation5], %s30
      %s33 = sshll.u32 %s1, 4
      %s34 = int_to_ptr.vmem [resolvable:$true] %s33
      %36 = dma.vmem_to_smem %s34, 128, [#allocation6], [#allocation5]
    $region9: #{tpu_custom_call.1} parent=1 // pred_fallthru
      _
    // Predicated region
    $region10: #{tpu_custom_call.1} parent=1 // pred_check
      _
    $region11: #{tpu_custom_call.1} parent=1 // pred_check_branch
      %38 = sbr.rel (0) target = $region13
    $region12: #{tpu_custom_call.1} parent=1 // pred_region
      %s40 = ssub.s32 128, 128
      %41 = vsyncadd [#allocation8], %s40
      %s43 = sshll.u32 %s2, 4
      %s44 = int_to_ptr.vmem [resolvable:$true] %s43
      %46 = dma.vmem_to_smem %s44, 128, [#allocation7], [#allocation8]
    $region13: #{tpu_custom_call.1} parent=1 // pred_fallthru
      _
    // Predicated region
    $region14: #{tpu_custom_call.1} parent=1 // pred_check
      _
    $region15: #{tpu_custom_call.1} parent=1 // pred_check_branch
      %48 = sbr.rel (0) target = $region17
    $region16: #{tpu_custom_call.1} parent=1 // pred_region
      %49 = dma.done [#allocation3], 2560
    $region17: #{tpu_custom_call.1} parent=1 // pred_fallthru
      _
    // Predicated region
    $region18: #{tpu_custom_call.1} parent=1 // pred_check
      _
    $region19: #{tpu_custom_call.1} parent=1 // pred_check_branch
      %51 = sbr.rel (0) target = $region21
    $region20: #{tpu_custom_call.1} parent=1 // pred_region
      %52 = dma.done [#allocation5], 128
    $region21: #{tpu_custom_call.1} parent=1 // pred_fallthru
      _
    // Predicated region
    $region22: #{tpu_custom_call.1} parent=1 // pred_check
      _
    $region23: #{tpu_custom_call.1} parent=1 // pred_check_branch
      %54 = sbr.rel (0) target = $region25
    $region24: #{tpu_custom_call.1} parent=1 // pred_region
      %55 = dma.done [#allocation8], 128
    $region25: #{tpu_custom_call.1} parent=1 // pred_fallthru
      _
    %56 = sfence
    %s57 = sld [smem:[#allocation6]]
    %s58 = sld [smem:[#allocation6 + $0x1]]
    %s59 = sld [smem:[#allocation6 + $0x2]]
    %s60 = sld [smem:[#allocation6 + $0x3]]
    %s61 = sld [smem:[#allocation6 + $0x80]]
    %s62 = sld [smem:[#allocation6 + $0x81]]
    %s63 = sld [smem:[#allocation6 + $0x82]]
    %s64 = sld [smem:[#allocation6 + $0x83]]
    %s65 = sld [smem:[#allocation6 + $0x100]]
    %s66 = sld [smem:[#allocation6 + $0x101]]
    %s67 = sld [smem:[#allocation6 + $0x102]]
    %s68 = sld [smem:[#allocation6 + $0x103]]
    %s69 = sld [smem:[#allocation6 + $0x180]]
    %s70 = sld [smem:[#allocation6 + $0x181]]
    %s71 = sld [smem:[#allocation6 + $0x182]]
    %s72 = sld [smem:[#allocation6 + $0x183]]
    %s73 = sld [smem:[#allocation6 + $0x200]]
    %s74 = sld [smem:[#allocation6 + $0x201]]
    %s75 = sld [smem:[#allocation6 + $0x202]]
    %s76 = sld [smem:[#allocation6 + $0x203]]
    %s77 = sld [smem:[#allocation7]]
    %s78 = sld [smem:[#allocation7 + $0x1]]
    %s79 = sld [smem:[#allocation7 + $0x2]]
    %s80 = sld [smem:[#allocation7 + $0x3]]
    %s81 = sld [smem:[#allocation7 + $0x4]]
    %s82 = sld [smem:[#allocation7 + $0x80]]
    %s83 = sld [smem:[#allocation7 + $0x81]]
    %s84 = sld [smem:[#allocation7 + $0x82]]
    %s85 = sld [smem:[#allocation7 + $0x83]]
    %s86 = sld [smem:[#allocation7 + $0x84]]
    %s87 = sld [smem:[#allocation7 + $0x100]]
    %s88 = sld [smem:[#allocation7 + $0x101]]
    %s89 = sld [smem:[#allocation7 + $0x102]]
    %s90 = sld [smem:[#allocation7 + $0x103]]
    %s91 = sld [smem:[#allocation7 + $0x104]]
    %s92 = sld [smem:[#allocation7 + $0x180]]
    %s93 = sld [smem:[#allocation7 + $0x181]]
    %s94 = sld [smem:[#allocation7 + $0x182]]
    %s95 = sld [smem:[#allocation7 + $0x183]]
    %s96 = sld [smem:[#allocation7 + $0x184]]
    %s97 = sld [smem:[#allocation7 + $0x200]]
    %s98 = sld [smem:[#allocation7 + $0x201]]
    %s99 = sld [smem:[#allocation7 + $0x202]]
    %s100 = sld [smem:[#allocation7 + $0x203]]
    %s101 = sld [smem:[#allocation7 + $0x204]]
    %v102 = vld [vmem:[#allocation2] sm:$0xff]
    %s103 = sadd.s32 0, 8
    %s104 = scalar_lea.vmem [#allocation2], %s103
    %v105 = vld [vmem:[%s104] sm:$0xff]
    %s106 = sadd.s32 0, 16
    %s107 = scalar_lea.vmem [#allocation2], %s106
    %v108 = vld [vmem:[%s107] sm:$0xff]
    %s109 = sadd.s32 0, 24
    %s110 = scalar_lea.vmem [#allocation2], %s109
    %v111 = vld [vmem:[%s110] sm:$0xff]
    %v112 = vstv %s57
    %v113 = vmul.f32 %v102, %v112
    %v114 = vstv %s58
    %v115 = vmul.f32 %v105, %v114
    %v116 = vadd.f32 %v113, %v115
    %v117 = vstv %s59
    %v118 = vmul.f32 %v108, %v117
    %v119 = vadd.f32 %v116, %v118
    %v120 = vstv %s60
    %v121 = vmul.f32 %v111, %v120
    %v122 = vadd.f32 %v119, %v121
    %v123 = vstv %s77
    %v124 = vadd.f32 %v122, %v123
    %v125 = vmax.f32 %v124, 0.0
    %v126 = vstv %s61
    %v127 = vmul.f32 %v102, %v126
    %v128 = vstv %s62
    %v129 = vmul.f32 %v105, %v128
    %v130 = vadd.f32 %v127, %v129
    %v131 = vstv %s63
    %v132 = vmul.f32 %v108, %v131
    %v133 = vadd.f32 %v130, %v132
    %v134 = vstv %s64
    %v135 = vmul.f32 %v111, %v134
    %v136 = vadd.f32 %v133, %v135
    %v137 = vstv %s78
    %v138 = vadd.f32 %v136, %v137
    %v139 = vmax.f32 %v138, 0.0
    %v140 = vadd.f32 %v125, %v139
    %v141 = vstv %s65
    %v142 = vmul.f32 %v102, %v141
    %v143 = vstv %s66
    %v144 = vmul.f32 %v105, %v143
    %v145 = vadd.f32 %v142, %v144
    %v146 = vstv %s67
    %v147 = vmul.f32 %v108, %v146
    %v148 = vadd.f32 %v145, %v147
    %v149 = vstv %s68
    %v150 = vmul.f32 %v111, %v149
    %v151 = vadd.f32 %v148, %v150
    %v152 = vstv %s79
    %v153 = vadd.f32 %v151, %v152
    %v154 = vmax.f32 %v153, 0.0
    %v155 = vadd.f32 %v140, %v154
    %v156 = vstv %s69
    %v157 = vmul.f32 %v102, %v156
    %v158 = vstv %s70
    %v159 = vmul.f32 %v105, %v158
    %v160 = vadd.f32 %v157, %v159
    %v161 = vstv %s71
    %v162 = vmul.f32 %v108, %v161
    %v163 = vadd.f32 %v160, %v162
    %v164 = vstv %s72
    %v165 = vmul.f32 %v111, %v164
    %v166 = vadd.f32 %v163, %v165
    %v167 = vstv %s80
    %v168 = vadd.f32 %v166, %v167
    %v169 = vmax.f32 %v168, 0.0
    %v170 = vadd.f32 %v155, %v169
    %v171 = vstv %s73
    %v172 = vmul.f32 %v102, %v171
    %v173 = vstv %s74
    %v174 = vmul.f32 %v105, %v173
    %v175 = vadd.f32 %v172, %v174
    %v176 = vstv %s75
    %v177 = vmul.f32 %v108, %v176
    %v178 = vadd.f32 %v175, %v177
    %v179 = vstv %s76
    %v180 = vmul.f32 %v111, %v179
    %v181 = vadd.f32 %v178, %v180
    %v182 = vstv %s81
    %v183 = vadd.f32 %v181, %v182
    %v184 = vmax.f32 %v183, 0.0
    %v185 = vadd.f32 %v170, %v184
    %s186 = sadd.s32 0, 32
    %s187 = scalar_lea.vmem [#allocation2], %s186
    %v188 = vld [vmem:[%s187] sm:$0xff]
    %s189 = sadd.s32 0, 40
    %s190 = scalar_lea.vmem [#allocation2], %s189
    %v191 = vld [vmem:[%s190] sm:$0xff]
    %s192 = sadd.s32 0, 48
    %s193 = scalar_lea.vmem [#allocation2], %s192
    %v194 = vld [vmem:[%s193] sm:$0xff]
    %s195 = sadd.s32 0, 56
    %s196 = scalar_lea.vmem [#allocation2], %s195
    %v197 = vld [vmem:[%s196] sm:$0xff]
    %v198 = vmul.f32 %v188, %v112
    %v199 = vmul.f32 %v191, %v114
    %v200 = vadd.f32 %v198, %v199
    %v201 = vmul.f32 %v194, %v117
    %v202 = vadd.f32 %v200, %v201
    %v203 = vmul.f32 %v197, %v120
    %v204 = vadd.f32 %v202, %v203
    %v205 = vstv %s82
    %v206 = vadd.f32 %v204, %v205
    %v207 = vmax.f32 %v206, 0.0
    %v208 = vmul.f32 %v188, %v126
    %v209 = vmul.f32 %v191, %v128
    %v210 = vadd.f32 %v208, %v209
    %v211 = vmul.f32 %v194, %v131
    %v212 = vadd.f32 %v210, %v211
    %v213 = vmul.f32 %v197, %v134
    %v214 = vadd.f32 %v212, %v213
    %v215 = vstv %s83
    %v216 = vadd.f32 %v214, %v215
    %v217 = vmax.f32 %v216, 0.0
    %v218 = vadd.f32 %v207, %v217
    %v219 = vmul.f32 %v188, %v141
    %v220 = vmul.f32 %v191, %v143
    %v221 = vadd.f32 %v219, %v220
    %v222 = vmul.f32 %v194, %v146
    %v223 = vadd.f32 %v221, %v222
    %v224 = vmul.f32 %v197, %v149
    %v225 = vadd.f32 %v223, %v224
    %v226 = vstv %s84
    %v227 = vadd.f32 %v225, %v226
    %v228 = vmax.f32 %v227, 0.0
    %v229 = vadd.f32 %v218, %v228
    %v230 = vmul.f32 %v188, %v156
    %v231 = vmul.f32 %v191, %v158
    %v232 = vadd.f32 %v230, %v231
    %v233 = vmul.f32 %v194, %v161
    %v234 = vadd.f32 %v232, %v233
    %v235 = vmul.f32 %v197, %v164
    %v236 = vadd.f32 %v234, %v235
    %v237 = vstv %s85
    %v238 = vadd.f32 %v236, %v237
    %v239 = vmax.f32 %v238, 0.0
    %v240 = vadd.f32 %v229, %v239
    %v241 = vmul.f32 %v188, %v171
    %v242 = vmul.f32 %v191, %v173
    %v243 = vadd.f32 %v241, %v242
    %v244 = vmul.f32 %v194, %v176
    %v245 = vadd.f32 %v243, %v244
    %v246 = vmul.f32 %v197, %v179
    %v247 = vadd.f32 %v245, %v246
    %v248 = vstv %s86
    %v249 = vadd.f32 %v247, %v248
    %v250 = vmax.f32 %v249, 0.0
    %v251 = vadd.f32 %v240, %v250
    %vm252 = vcmp.gt.f32.partialorder %v251, %v185
    %vm253 = vcmp.gt.f32.partialorder %v251, -inf
    %v254 = vsel %vm253, %v251, -inf
    %v255 = vsel %vm253, 1, 0
    %v256 = vsel %vm252, %v185, %v254
    %v257 = vsel %vm252, 0, %v255
    %v258 = vsel %vm252, %v251, %v185
    %v259 = vsel %vm252, 1, 0
    %s260 = sadd.s32 0, 64
    %s261 = scalar_lea.vmem [#allocation2], %s260
    %v262 = vld [vmem:[%s261] sm:$0xff]
    %s263 = sadd.s32 0, 72
    %s264 = scalar_lea.vmem [#allocation2], %s263
    %v265 = vld [vmem:[%s264] sm:$0xff]
    %s266 = sadd.s32 0, 80
    %s267 = scalar_lea.vmem [#allocation2], %s266
    %v268 = vld [vmem:[%s267] sm:$0xff]
    %s269 = sadd.s32 0, 88
    %s270 = scalar_lea.vmem [#allocation2], %s269
    %v271 = vld [vmem:[%s270] sm:$0xff]
    %v272 = vmul.f32 %v262, %v112
    %v273 = vmul.f32 %v265, %v114
    %v274 = vadd.f32 %v272, %v273
    %v275 = vmul.f32 %v268, %v117
    %v276 = vadd.f32 %v274, %v275
    %v277 = vmul.f32 %v271, %v120
    %v278 = vadd.f32 %v276, %v277
    %v279 = vstv %s87
    %v280 = vadd.f32 %v278, %v279
    %v281 = vmax.f32 %v280, 0.0
    %v282 = vmul.f32 %v262, %v126
    %v283 = vmul.f32 %v265, %v128
    %v284 = vadd.f32 %v282, %v283
    %v285 = vmul.f32 %v268, %v131
    %v286 = vadd.f32 %v284, %v285
    %v287 = vmul.f32 %v271, %v134
    %v288 = vadd.f32 %v286, %v287
    %v289 = vstv %s88
    %v290 = vadd.f32 %v288, %v289
    %v291 = vmax.f32 %v290, 0.0
    %v292 = vadd.f32 %v281, %v291
    %v293 = vmul.f32 %v262, %v141
    %v294 = vmul.f32 %v265, %v143
    %v295 = vadd.f32 %v293, %v294
    %v296 = vmul.f32 %v268, %v146
    %v297 = vadd.f32 %v295, %v296
    %v298 = vmul.f32 %v271, %v149
    %v299 = vadd.f32 %v297, %v298
    %v300 = vstv %s89
    %v301 = vadd.f32 %v299, %v300
    %v302 = vmax.f32 %v301, 0.0
    %v303 = vadd.f32 %v292, %v302
    %v304 = vmul.f32 %v262, %v156
    %v305 = vmul.f32 %v265, %v158
    %v306 = vadd.f32 %v304, %v305
    %v307 = vmul.f32 %v268, %v161
    %v308 = vadd.f32 %v306, %v307
    %v309 = vmul.f32 %v271, %v164
    %v310 = vadd.f32 %v308, %v309
    %v311 = vstv %s90
    %v312 = vadd.f32 %v310, %v311
    %v313 = vmax.f32 %v312, 0.0
    %v314 = vadd.f32 %v303, %v313
    %v315 = vmul.f32 %v262, %v171
    %v316 = vmul.f32 %v265, %v173
    %v317 = vadd.f32 %v315, %v316
    %v318 = vmul.f32 %v268, %v176
    %v319 = vadd.f32 %v317, %v318
    %v320 = vmul.f32 %v271, %v179
    %v321 = vadd.f32 %v319, %v320
    %v322 = vstv %s91
    %v323 = vadd.f32 %v321, %v322
    %v324 = vmax.f32 %v323, 0.0
    %v325 = vadd.f32 %v314, %v324
    %vm326 = vcmp.gt.f32.partialorder %v325, %v258
    %vm327 = vcmp.gt.f32.partialorder %v325, %v256
    %vm328 = vcmp.gt.f32.partialorder %v325, -inf
    %v329 = vsel %vm328, %v325, -inf
    %v330 = vsel %vm327, %v256, %v329
    %v331 = vsel %vm328, 2, 0
    %v332 = vsel %vm327, %v257, %v331
    %v333 = vsel %vm327, %v325, %v256
    %v334 = vsel %vm326, %v258, %v333
    %v335 = vsel %vm327, 2, %v257
    %v336 = vsel %vm326, %v259, %v335
    %v337 = vsel %vm326, %v325, %v258
    %v338 = vsel %vm326, 2, %v259
    %s339 = sadd.s32 0, 96
    %s340 = scalar_lea.vmem [#allocation2], %s339
    %v341 = vld [vmem:[%s340] sm:$0xff]
    %s342 = sadd.s32 0, 104
    %s343 = scalar_lea.vmem [#allocation2], %s342
    %v344 = vld [vmem:[%s343] sm:$0xff]
    %s345 = sadd.s32 0, 112
    %s346 = scalar_lea.vmem [#allocation2], %s345
    %v347 = vld [vmem:[%s346] sm:$0xff]
    %s348 = sadd.s32 0, 120
    %s349 = scalar_lea.vmem [#allocation2], %s348
    %v350 = vld [vmem:[%s349] sm:$0xff]
    %v351 = vmul.f32 %v341, %v112
    %v352 = vmul.f32 %v344, %v114
    %v353 = vadd.f32 %v351, %v352
    %v354 = vmul.f32 %v347, %v117
    %v355 = vadd.f32 %v353, %v354
    %v356 = vmul.f32 %v350, %v120
    %v357 = vadd.f32 %v355, %v356
    %v358 = vstv %s92
    %v359 = vadd.f32 %v357, %v358
    %v360 = vmax.f32 %v359, 0.0
    %v361 = vmul.f32 %v341, %v126
    %v362 = vmul.f32 %v344, %v128
    %v363 = vadd.f32 %v361, %v362
    %v364 = vmul.f32 %v347, %v131
    %v365 = vadd.f32 %v363, %v364
    %v366 = vmul.f32 %v350, %v134
    %v367 = vadd.f32 %v365, %v366
    %v368 = vstv %s93
    %v369 = vadd.f32 %v367, %v368
    %v370 = vmax.f32 %v369, 0.0
    %v371 = vadd.f32 %v360, %v370
    %v372 = vmul.f32 %v341, %v141
    %v373 = vmul.f32 %v344, %v143
    %v374 = vadd.f32 %v372, %v373
    %v375 = vmul.f32 %v347, %v146
    %v376 = vadd.f32 %v374, %v375
    %v377 = vmul.f32 %v350, %v149
    %v378 = vadd.f32 %v376, %v377
    %v379 = vstv %s94
    %v380 = vadd.f32 %v378, %v379
    %v381 = vmax.f32 %v380, 0.0
    %v382 = vadd.f32 %v371, %v381
    %v383 = vmul.f32 %v341, %v156
    %v384 = vmul.f32 %v344, %v158
    %v385 = vadd.f32 %v383, %v384
    %v386 = vmul.f32 %v347, %v161
    %v387 = vadd.f32 %v385, %v386
    %v388 = vmul.f32 %v350, %v164
    %v389 = vadd.f32 %v387, %v388
    %v390 = vstv %s95
    %v391 = vadd.f32 %v389, %v390
    %v392 = vmax.f32 %v391, 0.0
    %v393 = vadd.f32 %v382, %v392
    %v394 = vmul.f32 %v341, %v171
    %v395 = vmul.f32 %v344, %v173
    %v396 = vadd.f32 %v394, %v395
    %v397 = vmul.f32 %v347, %v176
    %v398 = vadd.f32 %v396, %v397
    %v399 = vmul.f32 %v350, %v179
    %v400 = vadd.f32 %v398, %v399
    %v401 = vstv %s96
    %v402 = vadd.f32 %v400, %v401
    %v403 = vmax.f32 %v402, 0.0
    %v404 = vadd.f32 %v393, %v403
    %vm405 = vcmp.gt.f32.partialorder %v404, %v337
    %vm406 = vcmp.gt.f32.partialorder %v404, %v334
    %vm407 = vcmp.gt.f32.partialorder %v404, %v330
    %v408 = vsel %vm407, %v404, %v330
    %v409 = vsel %vm406, %v334, %v408
    %v410 = vsel %vm407, 3, %v332
    %v411 = vsel %vm406, %v336, %v410
    %v412 = vsel %vm406, %v404, %v334
    %v413 = vsel %vm405, %v337, %v412
    %v414 = vsel %vm406, 3, %v336
    %v415 = vsel %vm405, %v338, %v414
    %v416 = vsel %vm405, %v404, %v337
    %v417 = vsel %vm405, 3, %v338
    %s418 = sadd.s32 0, 128
    %s419 = scalar_lea.vmem [#allocation2], %s418
    %v420 = vld [vmem:[%s419] sm:$0xff]
    %s421 = sadd.s32 0, 136
    %s422 = scalar_lea.vmem [#allocation2], %s421
    %v423 = vld [vmem:[%s422] sm:$0xff]
    %s424 = sadd.s32 0, 144
    %s425 = scalar_lea.vmem [#allocation2], %s424
    %v426 = vld [vmem:[%s425] sm:$0xff]
    %s427 = sadd.s32 0, 152
    %s428 = scalar_lea.vmem [#allocation2], %s427
    %v429 = vld [vmem:[%s428] sm:$0xff]
    %v430 = vmul.f32 %v420, %v112
    %v431 = vmul.f32 %v423, %v114
    %v432 = vadd.f32 %v430, %v431
    %v433 = vmul.f32 %v426, %v117
    %v434 = vadd.f32 %v432, %v433
    %v435 = vmul.f32 %v429, %v120
    %v436 = vadd.f32 %v434, %v435
    %v437 = vstv %s97
    %v438 = vadd.f32 %v436, %v437
    %v439 = vmax.f32 %v438, 0.0
    %v440 = vmul.f32 %v420, %v126
    %v441 = vmul.f32 %v423, %v128
    %v442 = vadd.f32 %v440, %v441
    %v443 = vmul.f32 %v426, %v131
    %v444 = vadd.f32 %v442, %v443
    %v445 = vmul.f32 %v429, %v134
    %v446 = vadd.f32 %v444, %v445
    %v447 = vstv %s98
    %v448 = vadd.f32 %v446, %v447
    %v449 = vmax.f32 %v448, 0.0
    %v450 = vadd.f32 %v439, %v449
    %v451 = vmul.f32 %v420, %v141
    %v452 = vmul.f32 %v423, %v143
    %v453 = vadd.f32 %v451, %v452
    %v454 = vmul.f32 %v426, %v146
    %v455 = vadd.f32 %v453, %v454
    %v456 = vmul.f32 %v429, %v149
    %v457 = vadd.f32 %v455, %v456
    %v458 = vstv %s99
    %v459 = vadd.f32 %v457, %v458
    %v460 = vmax.f32 %v459, 0.0
    %v461 = vadd.f32 %v450, %v460
    %v462 = vmul.f32 %v420, %v156
    %v463 = vmul.f32 %v423, %v158
    %v464 = vadd.f32 %v462, %v463
    %v465 = vmul.f32 %v426, %v161
    %v466 = vadd.f32 %v464, %v465
    %v467 = vmul.f32 %v429, %v164
    %v468 = vadd.f32 %v466, %v467
    %v469 = vstv %s100
    %v470 = vadd.f32 %v468, %v469
    %v471 = vmax.f32 %v470, 0.0
    %v472 = vadd.f32 %v461, %v471
    %v473 = vmul.f32 %v420, %v171
    %v474 = vmul.f32 %v423, %v173
    %v475 = vadd.f32 %v473, %v474
    %v476 = vmul.f32 %v426, %v176
    %v477 = vadd.f32 %v475, %v476
    %v478 = vmul.f32 %v429, %v179
    %v479 = vadd.f32 %v477, %v478
    %v480 = vstv %s101
    %v481 = vadd.f32 %v479, %v480
    %v482 = vmax.f32 %v481, 0.0
    %v483 = vadd.f32 %v472, %v482
    %vm484 = vcmp.gt.f32.partialorder %v483, %v416
    %vm485 = vcmp.gt.f32.partialorder %v483, %v413
    %vm486 = vcmp.gt.f32.partialorder %v483, %v409
    %v487 = vsel %vm486, %v483, %v409
    %v488 = vsel %vm485, %v413, %v487
    %v489 = vsel %vm486, 4, %v411
    %v490 = vsel %vm485, %v415, %v489
    %v491 = vsel %vm485, %v483, %v413
    %v492 = vsel %vm484, %v416, %v491
    %v493 = vsel %vm485, 4, %v415
    %v494 = vsel %vm484, %v417, %v493
    %v495 = vsel %vm484, %v483, %v416
    %v496 = vsel %vm484, 4, %v417
    %497 = vst [vmem:[#allocation9] sm:$0xff] %v495
    %s498 = scalar_lea.vmem [#allocation9], %s103
    %499 = vst [vmem:[%s498] sm:$0xff] %v492
    %s500 = scalar_lea.vmem [#allocation9], %s106
    %501 = vst [vmem:[%s500] sm:$0xff] %v488
    %502 = vst [vmem:[#allocation10] sm:$0xff] %v496
    %s503 = scalar_lea.vmem [#allocation10], %s103
    %504 = vst [vmem:[%s503] sm:$0xff] %v494
    %s505 = scalar_lea.vmem [#allocation10], %s106
    %506 = vst [vmem:[%s505] sm:$0xff] %v490
    // Predicated region
    $region26: #{tpu_custom_call.1} parent=1 // pred_check
      _
    $region27: #{tpu_custom_call.1} parent=1 // pred_check_branch
      %508 = sbr.rel (0) target = $region29
    $region28: #{tpu_custom_call.1} parent=1 // pred_region
      %s510 = ssub.s32 384, 384
      %511 = vsyncadd [#allocation4], %s510
      %s512 = sshll.u32 [#allocation9], 4
      %s513 = int_to_ptr.vmem [resolvable:$true] %s512
      %518 = dma.vmem_to_hbm [thread:$0]  %s513, 384, %s3, [#allocation4], 128, 128, 8
    $region29: #{tpu_custom_call.1} parent=1 // pred_fallthru
      _
    // Predicated region
    $region30: #{tpu_custom_call.1} parent=1 // pred_check
      _
    $region31: #{tpu_custom_call.1} parent=1 // pred_check_branch
      %520 = sbr.rel (0) target = $region33
    $region32: #{tpu_custom_call.1} parent=1 // pred_region
      %s522 = ssub.s32 384, 384
      %523 = vsyncadd [#allocation11], %s522
      %s524 = sshll.u32 [#allocation10], 4
      %s525 = int_to_ptr.vmem [resolvable:$true] %s524
      %530 = dma.vmem_to_hbm [thread:$0]  %s525, 384, %s4, [#allocation11], 128, 128, 8
    $region33: #{tpu_custom_call.1} parent=1 // pred_fallthru
      _
    // Predicated region
    $region34: #{tpu_custom_call.1} parent=1 // pred_check
      _
    $region35: #{tpu_custom_call.1} parent=1 // pred_check_branch
      %532 = sbr.rel (0) target = $region37
    $region36: #{tpu_custom_call.1} parent=1 // pred_region
      %533 = dma.done [#allocation4], 384
    $region37: #{tpu_custom_call.1} parent=1 // pred_fallthru
      _
    // Predicated region
    $region38: #{tpu_custom_call.1} parent=1 // pred_check
      _
    $region39: #{tpu_custom_call.1} parent=1 // pred_check_branch
      %535 = sbr.rel (0) target = $region41
    $region40: #{tpu_custom_call.1} parent=1 // pred_region
      %536 = dma.done [#allocation11], 384
    $region41: #{tpu_custom_call.1} parent=1 // pred_fallthru
      _
    %537 = vsyncpa [#allocation3], 1
    %538 = vsyncpa [#allocation4], 1
    %539 = vsyncpa [#allocation11], 1
    %540 = vsyncpa [#allocation5], 1
    %541 = vsyncpa [#allocation8], 1

</llo_original>
